<compile_context>
chip_gen: v7x
topology: tpu7x:2x2x1
jax: 0.10.0
libtpu: 0.0.40
codegen_flags: <defaults>
</compile_context>

<pallas_src>
import functools
import jax
import jax.numpy as jnp
from jax.experimental import pallas as pl
from jax.experimental.pallas import tpu as pltpu

_LANE = 128
_SUBLANE = 8


def _round_up(v, m):
    return (v + m - 1) // m * m


def _cdiv(a, b):
    return (a + b - 1) // b


def _vmem_budget_bytes():
    """Generation-aware VMEM budget: ~80% of physical per-core VMEM."""
    cap = 64 * 1024 * 1024  # conservative fallback (v7x physical per-TC)
    try:
        cap = int(pltpu.get_tpu_info().vmem_capacity_bytes)
    except Exception:
        pass
    return (cap * 4) // 5


# ----------------------------- kernel bodies --------------------------------
def _scatter_edge_tile(idx, x, rbf, wrbf, acc_ref, *, node_base, node_chunk, mxu_dtype):
    """Accumulate lin_rbf(rbf)*x for one edge tile into the node accumulator.

    idx  : [1, TE]  int32 (lane-dense)
    x    : [TE, H]  mxu_dtype
    rbf  : [TE, R]  mxu_dtype
    wrbf : [R, H]   mxu_dtype
    acc_ref : [NB, H] f32 VMEM scratch accumulator (NB % node_chunk == 0)
    """
    # t = lin_rbf(rbf) * x : MXU matmul with f32 accumulation, mul in f32 (VPU).
    t = jnp.dot(rbf, wrbf, preferred_element_type=jnp.float32)          # [TE, H] f32
    t = t * x.astype(jnp.float32)
    t_mxu = t.astype(mxu_dtype)

    idx_local = idx - node_base                                         # [1, TE]
    te = idx_local.shape[1]
    nb = acc_ref.shape[0]
    # Node-chunked, pre-transposed one-hot scatter on the MXU: only chunk-sized
    # temporaries are live at a time and the accumulator RMW touches node_chunk
    # rows per matmul (bounded vst pressure on v5e).
    for nc in range(nb // node_chunk):
        base = nc * node_chunk
        iota = jax.lax.broadcasted_iota(jnp.int32, (node_chunk, te), 0) + base
        onehot = (iota == idx_local).astype(mxu_dtype)                  # exact 0/1 in bf16
        acc_ref[base:base + node_chunk, :] += jnp.dot(
            onehot, t_mxu, preferred_element_type=jnp.float32)


def _mlp_body(s, wup_ref, wlin_ref, blin_ref, num_layers, mxu_dtype):
    h = jnp.dot(s, wup_ref[...], preferred_element_type=jnp.float32)    # [TN, C] f32
    for l in range(num_layers):
        z = jnp.dot(h.astype(mxu_dtype), wlin_ref[l],
                    preferred_element_type=jnp.float32) + blin_ref[l]   # bias add in f32
        h = z * jax.nn.sigmoid(z)                                       # SiLU (VPU/EUP)
    return h


def _scatter_kernel(idx_ref, x_ref, rbf_ref, wrbf_ref, s_ref, acc_ref,
                    *, node_block, node_chunk, mxu_dtype):
    e = pl.program_id(1)

    @pl.when(e == 0)
    def _():
        acc_ref[...] = jnp.zeros_like(acc_ref)

    _scatter_edge_tile(idx_ref[...], x_ref[...], rbf_ref[...], wrbf_ref[...], acc_ref,
                       node_base=pl.program_id(0) * node_block,
                       node_chunk=node_chunk, mxu_dtype=mxu_dtype)

    @pl.when(e == pl.num_programs(1) - 1)
    def _():
        s_ref[...] = acc_ref[...].astype(s_ref.dtype)   # bf16 writeback, f32 accumulation


def _mlp_kernel(s_ref, wup_ref, wlin_ref, blin_ref, o_ref, *, num_layers, mxu_dtype):
    o_ref[...] = _mlp_body(s_ref[...], wup_ref, wlin_ref, blin_ref,
                           num_layers, mxu_dtype).astype(o_ref.dtype)


def _fused_kernel(idx_ref, x_ref, rbf_ref, wrbf_ref, wup_ref, wlin_ref, blin_ref,
                  o_ref, acc_ref, *, num_layers, node_chunk, mxu_dtype):
    e = pl.program_id(0)

    @pl.when(e == 0)
    def _():
        acc_ref[...] = jnp.zeros_like(acc_ref)

    _scatter_edge_tile(idx_ref[...], x_ref[...], rbf_ref[...], wrbf_ref[...], acc_ref,
                       node_base=0, node_chunk=node_chunk, mxu_dtype=mxu_dtype)

    @pl.when(e == pl.num_programs(0) - 1)
    def _():
        o_ref[...] = _mlp_body(acc_ref[...].astype(mxu_dtype), wup_ref, wlin_ref,
                               blin_ref, num_layers, mxu_dtype).astype(o_ref.dtype)


# ------------------------------- wrappers ------------------------------------
def prepare_weights(w_rbf, w_up, w_lins, b_lins, *, mxu_dtype=jnp.bfloat16):
    """Pad + cast weights once (cache the result across calls in a loop)."""
    R, H = w_rbf.shape
    C = w_up.shape[1]
    L = w_lins.shape[0]
    H_pad = _round_up(H, _LANE)
    C_pad = _round_up(C, _LANE)
    R_pad = _round_up(max(R, _SUBLANE), _SUBLANE)
    b_lins = jnp.asarray(b_lins).reshape(L, 1, C)   # accepts [L,C] or [L,1,C]

    wrbf_p = jnp.zeros((R_pad, H_pad), mxu_dtype).at[:R, :H].set(w_rbf.astype(mxu_dtype))
    wup_p = jnp.zeros((H_pad, C_pad), mxu_dtype).at[:H, :C].set(w_up.astype(mxu_dtype))
    wlin_p = jnp.zeros((L, C_pad, C_pad), mxu_dtype).at[:, :C, :C].set(w_lins.astype(mxu_dtype))
    blin_p = jnp.zeros((L, 1, C_pad), jnp.float32).at[:, :, :C].set(b_lins.astype(jnp.float32))

    meta = dict(R=R, H=H, C=C, L=L, R_pad=R_pad, H_pad=H_pad, C_pad=C_pad,
                mxu_dtype=mxu_dtype)
    return dict(wrbf=wrbf_p, wup=wup_p, wlin=wlin_p, blin=blin_p, meta=meta)


def output_pp_block(x, rbf, idx, weights, *, num_nodes, edge_tile=None):
    meta = weights["meta"]
    R, H, C, L = meta["R"], meta["H"], meta["C"], meta["L"]
    R_pad, H_pad, C_pad = meta["R_pad"], meta["H_pad"], meta["C_pad"]
    mxu_dtype = meta["mxu_dtype"]
    mxu_isz = jnp.dtype(mxu_dtype).itemsize
    f32 = jnp.float32

    E = x.shape[0]
    assert x.shape[1] == H and rbf.shape == (E, R)
    idx = idx.reshape(-1).astype(jnp.int32)

    # ---- node-axis tiling ---------------------------------------------------
    N_pad = _round_up(max(num_nodes, _SUBLANE), _SUBLANE)
    if N_pad <= 256:
        node_chunk = N_pad
        node_block = N_pad
        n_node_blocks = 1
    else:
        node_chunk = 256
        N_pad = _round_up(N_pad, node_chunk)
        n_node_blocks = _cdiv(N_pad, 2048)
        node_block = _round_up(_cdiv(N_pad, n_node_blocks), node_chunk)
        N_pad = node_block * n_node_blocks

    fused = (n_node_blocks == 1) and (N_pad <= 1024)

    # ---- edge-axis tiling (VMEM-budgeted, tail-padding aware) ---------------
    budget = _vmem_budget_bytes()

    def vmem_fits(te):
        stream = 2 * te * (H_pad * mxu_isz + R_pad * mxu_isz + 4)      # x, rbf, idx (dbl-buffered)
        wts = 2 * R_pad * H_pad * mxu_isz                              # wrbf
        acc = node_block * H_pad * 4                                   # f32 scratch (single)
        temps = te * H_pad * (4 + mxu_isz)                             # t f32 + mxu copy
        temps += node_chunk * te * (4 + mxu_isz)                       # iota + one-hot
        temps += node_chunk * H_pad * 4                                # chunk matmul result
        if fused:
            wts += 2 * ((H_pad * C_pad + L * C_pad * C_pad) * mxu_isz + L * C_pad * 4)
            out = 2 * node_block * C_pad * 4                           # h temp + output block
        else:
            out = 2 * node_block * H_pad * mxu_isz                     # s output block
        return stream + wts + acc + temps + out <= budget

    if edge_tile is None:
        TE, best_cost = 128, None
        for te in (1024, 512, 256, 128):
            if not vmem_fits(te):
                continue
            steps = _cdiv(E, te)
            cost = steps * te + 32 * steps   # padded work + per-step-overhead proxy
            if best_cost is None or cost < best_cost or (cost == best_cost and te > TE):
                TE, best_cost = te, cost
    else:
        TE = max(_LANE, _round_up(edge_tile, _LANE))
        while TE > _LANE and not vmem_fits(TE):
            TE //= 2
    E_pad = _round_up(max(E, TE), TE)

    # ---- pad dynamic inputs (zero padding is exact; padded edges get idx =
    #      N_pad, which matches no node row, so they contribute nothing) -------
    x_p = jnp.zeros((E_pad, H_pad), mxu_dtype).at[:E, :H].set(x.astype(mxu_dtype))
    rbf_p = jnp.zeros((E_pad, R_pad), mxu_dtype).at[:E, :R].set(rbf.astype(mxu_dtype))
    idx_p = jnp.full((1, E_pad), N_pad, jnp.int32).at[0, :E].set(idx)

    if fused:
        # Single call: scatter over edges, MLP in the last-step epilogue.
        out = pl.pallas_call(
            functools.partial(_fused_kernel, num_layers=L, node_chunk=node_chunk,
                              mxu_dtype=mxu_dtype),
            out_shape=jax.ShapeDtypeStruct((N_pad, C_pad), f32),
            grid_spec=pltpu.PrefetchScalarGridSpec(
                num_scalar_prefetch=0,
                grid=(E_pad // TE,),
                in_specs=[
                    pl.BlockSpec((1, TE), lambda e: (0, e)),            # idx (lane-dense)
                    pl.BlockSpec((TE, H_pad), lambda e: (e, 0)),        # x   (mxu_dtype)
                    pl.BlockSpec((TE, R_pad), lambda e: (e, 0)),        # rbf (mxu_dtype)
                    pl.BlockSpec((R_pad, H_pad), lambda e: (0, 0)),     # W_rbf (resident)
                    pl.BlockSpec((H_pad, C_pad), lambda e: (0, 0)),     # W_up  (resident)
                    pl.BlockSpec((L, C_pad, C_pad), lambda e: (0, 0, 0)),
                    pl.BlockSpec((L, 1, C_pad), lambda e: (0, 0, 0)),
                ],
                out_specs=pl.BlockSpec((N_pad, C_pad), lambda e: (0, 0)),  # resident output
                scratch_shapes=[pltpu.VMEM((N_pad, H_pad), f32)],          # f32 accumulator
            ),
            compiler_params=pltpu.CompilerParams(
                dimension_semantics=("arbitrary",),
                vmem_limit_bytes=budget,
            ),
        )(idx_p, x_p, rbf_p, weights["wrbf"], weights["wup"], weights["wlin"], weights["blin"])
        return out[:num_nodes, :C]

    # ---- call 1: edge-reduction scatter; node blocks are independent --------
    s = pl.pallas_call(
        functools.partial(_scatter_kernel, node_block=node_block, node_chunk=node_chunk,
                          mxu_dtype=mxu_dtype),
        out_shape=jax.ShapeDtypeStruct((N_pad, H_pad), mxu_dtype),      # bf16 s (f32 in scratch)
        grid_spec=pltpu.PrefetchScalarGridSpec(
            num_scalar_prefetch=0,
            grid=(n_node_blocks, E_pad // TE),
            in_specs=[
                pl.BlockSpec((1, TE), lambda n, e: (0, e)),
                pl.BlockSpec((TE, H_pad), lambda n, e: (e, 0)),
                pl.BlockSpec((TE, R_pad), lambda n, e: (e, 0)),
                pl.BlockSpec((R_pad, H_pad), lambda n, e: (0, 0)),
            ],
            out_specs=pl.BlockSpec((node_block, H_pad), lambda n, e: (n, 0)),
            scratch_shapes=[pltpu.VMEM((node_block, H_pad), f32)],
        ),
        compiler_params=pltpu.CompilerParams(
            dimension_semantics=("parallel", "arbitrary"),
            vmem_limit_bytes=budget,
        ),
    )(idx_p, x_p, rbf_p, weights["wrbf"])

    # ---- call 2: node-tiled MLP (TN=256 fills the 256x256 MXU on v6e/v7x) ---
    TN = min(N_pad, 256)
    out = pl.pallas_call(
        functools.partial(_mlp_kernel, num_layers=L, mxu_dtype=mxu_dtype),
        out_shape=jax.ShapeDtypeStruct((N_pad, C_pad), f32),
        grid_spec=pltpu.PrefetchScalarGridSpec(
            num_scalar_prefetch=0,
            grid=(N_pad // TN,),
            in_specs=[
                pl.BlockSpec((TN, H_pad), lambda n: (n, 0)),
                pl.BlockSpec((H_pad, C_pad), lambda n: (0, 0)),
                pl.BlockSpec((L, C_pad, C_pad), lambda n: (0, 0, 0)),
                pl.BlockSpec((L, 1, C_pad), lambda n: (0, 0, 0)),
            ],
            out_specs=pl.BlockSpec((TN, C_pad), lambda n: (n, 0)),      # lane-dense output
        ),
        compiler_params=pltpu.CompilerParams(
            dimension_semantics=("parallel",),
            vmem_limit_bytes=budget,
        ),
    )(s, weights["wup"], weights["wlin"], weights["blin"])

    return out[:num_nodes, :C]


# ------------------------------- reference -----------------------------------
def reference(x, rbf, idx, w_rbf, w_up, w_lins, b_lins, *, num_nodes):
    t = (rbf @ w_rbf) * x
    s = jnp.zeros((num_nodes, t.shape[1]), jnp.float32).at[idx].add(t)
    h = s @ w_up
    for l in range(w_lins.shape[0]):
        h = jax.nn.silu(h @ w_lins[l] + b_lins[l])
    return h


def _rel_err(a, b):
    return float(jnp.linalg.norm(a - b) / (jnp.linalg.norm(b) + 1e-12))


if __name__ == "__main__":
    key = jax.random.PRNGKey(0)
    k = jax.random.split(key, 12)

    R, H, C, L = 6, 64, 96, 3   # num_radial, hidden, out_emb_channels, num_layers

    # Deterministic synthetic weights (glorot_orthogonal replaced by scaled normals);
    # biases nonzero so the bias path is actually exercised (module init zeroes them).
    w_rbf = jax.random.normal(k[0], (R, H), jnp.float32) * (2.0 / (R + H)) ** 0.5
    w_up = jax.random.normal(k[1], (H, C), jnp.float32) * (2.0 / (H + C)) ** 0.5
    w_lins = jax.random.normal(k[2], (L, C, C), jnp.float32) * (2.0 / (C + C)) ** 0.5
    b_lins = 0.1 * jax.random.normal(k[3], (L, C), jnp.float32)

    weights_f32 = prepare_weights(w_rbf, w_up, w_lins, b_lins, mxu_dtype=jnp.float32)
    weights_bf16 = prepare_weights(w_rbf, w_up, w_lins, b_lins, mxu_dtype=jnp.bfloat16)

    # ---- test 1: small graph -> fused single-call path ----------------------
    E1, N1 = 300, 10
    x1 = jax.random.normal(k[4], (E1, H), jnp.float32)
    rbf1 = jax.random.normal(k[5], (E1, R), jnp.float32)
    idx1 = jax.random.randint(k[6], (E1,), 0, N1, dtype=jnp.int32)
    ref1 = reference(x1, rbf1, idx1, w_rbf, w_up, w_lins, b_lins, num_nodes=N1)

    o1f = jax.block_until_ready(output_pp_block(x1, rbf1, idx1, weights_f32, num_nodes=N1))
    assert o1f.shape == (N1, C)
    assert _rel_err(o1f, ref1) < 1e-2, f"fused f32 mismatch: {_rel_err(o1f, ref1)}"

    o1b = jax.block_until_ready(output_pp_block(x1, rbf1, idx1, weights_bf16, num_nodes=N1))
    assert o1b.shape == (N1, C)
    assert _rel_err(o1b, ref1) < 5e-2, f"fused bf16 mismatch: {_rel_err(o1b, ref1)}"

    # ---- test 2: larger graph -> two-call path (node-chunked scatter + MLP) -
    E2, N2 = 1200, 1100
    x2 = jax.random.normal(k[7], (E2, H), jnp.float32)
    rbf2 = jax.random.normal(k[8], (E2, R), jnp.float32)
    idx2 = jax.random.randint(k[9], (E2,), 0, N2, dtype=jnp.int32)
    ref2 = reference(x2, rbf2, idx2, w_rbf, w_up, w_lins, b_lins, num_nodes=N2)

    o2f = jax.block_until_ready(output_pp_block(x2, rbf2, idx2, weights_f32, num_nodes=N2))
    assert o2f.shape == (N2, C)
    assert _rel_err(o2f, ref2) < 1e-2, f"two-call f32 mismatch: {_rel_err(o2f, ref2)}"

    o2b = jax.block_until_ready(output_pp_block(x2, rbf2, idx2, weights_bf16, num_nodes=N2))
    assert o2b.shape == (N2, C)
    assert _rel_err(o2b, ref2) < 5e-2, f"two-call bf16 mismatch: {_rel_err(o2b, ref2)}"

    print("KERNEL_OK")
</pallas_src>

<mosaic_0001>
module attributes {stable_mosaic.version = 11 : i64} {
  func.func @_fused_kernel(%arg0: i32, %arg1: memref<1x128xi32, #tpu.memory_space<vmem>>, %arg2: memref<128x128xf32, #tpu.memory_space<vmem>>, %arg3: memref<128x8xf32, #tpu.memory_space<vmem>>, %arg4: memref<8x128xf32, #tpu.memory_space<vmem>>, %arg5: memref<128x128xf32, #tpu.memory_space<vmem>>, %arg6: memref<3x128x128xf32, #tpu.memory_space<vmem>>, %arg7: memref<3x1x128xf32, #tpu.memory_space<vmem>>, %arg8: memref<16x128xf32, #tpu.memory_space<vmem>>, %arg9: memref<16x128xf32, #tpu.memory_space<vmem>>) attributes {dimension_semantics = [#tpu.dimension_semantics<arbitrary>], iteration_bounds = array<i64: 3>, scalar_prefetch = 0 : i64, scratch_operands = 1 : i64, tpu.core_type = #tpu.core_type<tc>, window_params = [{transform_indices = @transform_0, window_bounds = array<i64: 1, 128>}, {transform_indices = @transform_1, window_bounds = array<i64: 128, 128>}, {transform_indices = @transform_2, window_bounds = array<i64: 128, 8>}, {pipeline_mode = #tpu.pipeline_mode<synchronous>, transform_indices = @transform_3, window_bounds = array<i64: 8, 128>}, {pipeline_mode = #tpu.pipeline_mode<synchronous>, transform_indices = @transform_4, window_bounds = array<i64: 128, 128>}, {pipeline_mode = #tpu.pipeline_mode<synchronous>, transform_indices = @transform_5, window_bounds = array<i64: 3, 128, 128>}, {pipeline_mode = #tpu.pipeline_mode<synchronous>, transform_indices = @transform_6, window_bounds = array<i64: 3, 1, 128>}, {pipeline_mode = #tpu.pipeline_mode<synchronous>, transform_indices = @transform_7, window_bounds = array<i64: 16, 128>}]} {
    %c0_i32 = arith.constant 0 : i32
    %0 = arith.cmpi eq, %arg0, %c0_i32 : i32
    %1 = arith.extui %0 : i1 to i32
    %c0_i32_0 = arith.constant 0 : i32
    %2 = arith.cmpi ne, %1, %c0_i32_0 : i32
    scf.if %2 {
      %cst_16 = arith.constant 0.000000e+00 : f32
      %25 = vector.broadcast %cst_16 : f32 to vector<16x128xf32>
      %c0_17 = arith.constant 0 : index
      %c0_18 = arith.constant 0 : index
      %26 = vector.load %arg9[%c0_17, %c0_18] : memref<16x128xf32, #tpu.memory_space<vmem>>, vector<16x128xf32>
      tpu.vector_store %arg9[%c0_17, %c0_18], %25 {strides = array<i32>} : memref<16x128xf32, #tpu.memory_space<vmem>>, vector<16x128xf32>,
    } else {
    }
    %c0 = arith.constant 0 : index
    %c0_1 = arith.constant 0 : index
    %3 = vector.load %arg1[%c0, %c0_1] : memref<1x128xi32, #tpu.memory_space<vmem>>, vector<1x128xi32>
    %c0_2 = arith.constant 0 : index
    %c0_3 = arith.constant 0 : index
    %4 = vector.load %arg2[%c0_2, %c0_3] : memref<128x128xf32, #tpu.memory_space<vmem>>, vector<128x128xf32>
    %c0_4 = arith.constant 0 : index
    %c0_5 = arith.constant 0 : index
    %5 = vector.load %arg3[%c0_4, %c0_5] : memref<128x8xf32, #tpu.memory_space<vmem>>, vector<128x8xf32>
    %c0_6 = arith.constant 0 : index
    %c0_7 = arith.constant 0 : index
    %6 = vector.load %arg4[%c0_6, %c0_7] : memref<8x128xf32, #tpu.memory_space<vmem>>, vector<8x128xf32>
    %cst = arith.constant dense<0.000000e+00> : vector<128x128xf32>
    %7 = tpu.matmul %5, %6, %cst {dimension_numbers = #tpu.dot_dimension_numbers<[1], [0], [0], [1], [0, 0, 1, 1], [], []>} : vector<128x8xf32>, vector<8x128xf32>, vector<128x128xf32> -> vector<128x128xf32>
    %8 = arith.mulf %7, %4 : vector<128x128xf32>
    %c0_i32_8 = arith.constant 0 : i32
    %9 = vector.broadcast %c0_i32_8 : i32 to vector<1x128xi32>
    %10 = arith.subi %3, %9 : vector<1x128xi32>
    %11 = tpu.iota {dimensions = array<i32: 0>} : vector<16x128xi32>
    %c0_i32_9 = arith.constant 0 : i32
    %12 = vector.broadcast %c0_i32_9 : i32 to vector<16x128xi32>
    %13 = arith.addi %11, %12 : vector<16x128xi32>
    %14 = vector.broadcast %10 : vector<1x128xi32> to vector<16x128xi32>
    %15 = arith.cmpi eq, %13, %14 : vector<16x128xi32>
    %16 = arith.extui %15 : vector<16x128xi1> to vector<16x128xi32>
    %17 = arith.sitofp %16 : vector<16x128xi32> to vector<16x128xf32>
    %c0_10 = arith.constant 0 : index
    %c0_11 = arith.constant 0 : index
    %18 = vector.load %arg9[%c0_10, %c0_11] : memref<16x128xf32, #tpu.memory_space<vmem>>, vector<16x128xf32>
    %cst_12 = arith.constant dense<0.000000e+00> : vector<16x128xf32>
    %19 = tpu.matmul %17, %8, %cst_12 {dimension_numbers = #tpu.dot_dimension_numbers<[1], [0], [0], [1], [0, 0, 1, 1], [], []>} : vector<16x128xf32>, vector<128x128xf32>, vector<16x128xf32> -> vector<16x128xf32>
    %20 = arith.addf %18, %19 : vector<16x128xf32>
    %c0_13 = arith.constant 0 : index
    %c0_14 = arith.constant 0 : index
    %21 = vector.load %arg9[%c0_13, %c0_14] : memref<16x128xf32, #tpu.memory_space<vmem>>, vector<16x128xf32>
    tpu.vector_store %arg9[%c0_13, %c0_14], %20 {strides = array<i32>} : memref<16x128xf32, #tpu.memory_space<vmem>>, vector<16x128xf32>,
    %c2_i32 = arith.constant 2 : i32
    %22 = arith.cmpi eq, %arg0, %c2_i32 : i32
    %23 = arith.extui %22 : i1 to i32
    %c0_i32_15 = arith.constant 0 : i32
    %24 = arith.cmpi ne, %23, %c0_i32_15 : i32
    scf.if %24 {
      %c0_16 = arith.constant 0 : index
      %c0_17 = arith.constant 0 : index
      %25 = vector.load %arg9[%c0_16, %c0_17] : memref<16x128xf32, #tpu.memory_space<vmem>>, vector<16x128xf32>
      %c0_18 = arith.constant 0 : index
      %c0_19 = arith.constant 0 : index
      %26 = vector.load %arg5[%c0_18, %c0_19] : memref<128x128xf32, #tpu.memory_space<vmem>>, vector<128x128xf32>
      %cst_20 = arith.constant dense<0.000000e+00> : vector<16x128xf32>
      %27 = tpu.matmul %25, %26, %cst_20 {dimension_numbers = #tpu.dot_dimension_numbers<[1], [0], [0], [1], [0, 0, 1, 1], [], []>} : vector<16x128xf32>, vector<128x128xf32>, vector<16x128xf32> -> vector<16x128xf32>
      %c0_21 = arith.constant 0 : index
      %c0_22 = arith.constant 0 : index
      %c0_23 = arith.constant 0 : index
      %28 = vector.load %arg6[%c0_21, %c0_22, %c0_23] : memref<3x128x128xf32, #tpu.memory_space<vmem>>, vector<1x128x128xf32>
      %29 = vector.shape_cast %28 : vector<1x128x128xf32> to vector<128x128xf32>
      %cst_24 = arith.constant dense<0.000000e+00> : vector<16x128xf32>
      %30 = tpu.matmul %27, %29, %cst_24 {dimension_numbers = #tpu.dot_dimension_numbers<[1], [0], [0], [1], [0, 0, 1, 1], [], []>} : vector<16x128xf32>, vector<128x128xf32>, vector<16x128xf32> -> vector<16x128xf32>
      %c0_25 = arith.constant 0 : index
      %c0_26 = arith.constant 0 : index
      %c0_27 = arith.constant 0 : index
      %31 = vector.load %arg7[%c0_25, %c0_26, %c0_27] : memref<3x1x128xf32, #tpu.memory_space<vmem>>, vector<1x1x128xf32>
      %32 = vector.shape_cast %31 : vector<1x1x128xf32> to vector<1x128xf32>
      %33 = vector.broadcast %32 : vector<1x128xf32> to vector<16x128xf32>
      %34 = arith.addf %30, %33 : vector<16x128xf32>
      %35 = arith.negf %34 : vector<16x128xf32>
      %36 = math.exp %35 : vector<16x128xf32>
      %cst_28 = arith.constant 1.000000e+00 : f32
      %37 = vector.broadcast %cst_28 : f32 to vector<16x128xf32>
      %38 = arith.addf %37, %36 : vector<16x128xf32>
      %39 = arith.divf %37, %38 : vector<16x128xf32>
      %40 = arith.mulf %34, %39 : vector<16x128xf32>
      %c1 = arith.constant 1 : index
      %c0_29 = arith.constant 0 : index
      %c0_30 = arith.constant 0 : index
      %41 = vector.load %arg6[%c1, %c0_29, %c0_30] : memref<3x128x128xf32, #tpu.memory_space<vmem>>, vector<1x128x128xf32>
      %42 = vector.shape_cast %41 : vector<1x128x128xf32> to vector<128x128xf32>
      %cst_31 = arith.constant dense<0.000000e+00> : vector<16x128xf32>
      %43 = tpu.matmul %40, %42, %cst_31 {dimension_numbers = #tpu.dot_dimension_numbers<[1], [0], [0], [1], [0, 0, 1, 1], [], []>} : vector<16x128xf32>, vector<128x128xf32>, vector<16x128xf32> -> vector<16x128xf32>
      %c1_32 = arith.constant 1 : index
      %c0_33 = arith.constant 0 : index
      %c0_34 = arith.constant 0 : index
      %44 = vector.load %arg7[%c1_32, %c0_33, %c0_34] : memref<3x1x128xf32, #tpu.memory_space<vmem>>, vector<1x1x128xf32>
      %45 = vector.shape_cast %44 : vector<1x1x128xf32> to vector<1x128xf32>
      %46 = vector.broadcast %45 : vector<1x128xf32> to vector<16x128xf32>
      %47 = arith.addf %43, %46 : vector<16x128xf32>
      %48 = arith.negf %47 : vector<16x128xf32>
      %49 = math.exp %48 : vector<16x128xf32>
      %cst_35 = arith.constant 1.000000e+00 : f32
      %50 = vector.broadcast %cst_35 : f32 to vector<16x128xf32>
      %51 = arith.addf %50, %49 : vector<16x128xf32>
      %52 = arith.divf %50, %51 : vector<16x128xf32>
      %53 = arith.mulf %47, %52 : vector<16x128xf32>
      %c2 = arith.constant 2 : index
      %c0_36 = arith.constant 0 : index
      %c0_37 = arith.constant 0 : index
      %54 = vector.load %arg6[%c2, %c0_36, %c0_37] : memref<3x128x128xf32, #tpu.memory_space<vmem>>, vector<1x128x128xf32>
      %55 = vector.shape_cast %54 : vector<1x128x128xf32> to vector<128x128xf32>
      %cst_38 = arith.constant dense<0.000000e+00> : vector<16x128xf32>
      %56 = tpu.matmul %53, %55, %cst_38 {dimension_numbers = #tpu.dot_dimension_numbers<[1], [0], [0], [1], [0, 0, 1, 1], [], []>} : vector<16x128xf32>, vector<128x128xf32>, vector<16x128xf32> -> vector<16x128xf32>
      %c2_39 = arith.constant 2 : index
      %c0_40 = arith.constant 0 : index
      %c0_41 = arith.constant 0 : index
      %57 = vector.load %arg7[%c2_39, %c0_40, %c0_41] : memref<3x1x128xf32, #tpu.memory_space<vmem>>, vector<1x1x128xf32>
      %58 = vector.shape_cast %57 : vector<1x1x128xf32> to vector<1x128xf32>
      %59 = vector.broadcast %58 : vector<1x128xf32> to vector<16x128xf32>
      %60 = arith.addf %56, %59 : vector<16x128xf32>
      %61 = arith.negf %60 : vector<16x128xf32>
      %62 = math.exp %61 : vector<16x128xf32>
      %cst_42 = arith.constant 1.000000e+00 : f32
      %63 = vector.broadcast %cst_42 : f32 to vector<16x128xf32>
      %64 = arith.addf %63, %62 : vector<16x128xf32>
      %65 = arith.divf %63, %64 : vector<16x128xf32>
      %66 = arith.mulf %60, %65 : vector<16x128xf32>
      %c0_43 = arith.constant 0 : index
      %c0_44 = arith.constant 0 : index
      %67 = vector.load %arg8[%c0_43, %c0_44] : memref<16x128xf32, #tpu.memory_space<vmem>>, vector<16x128xf32>
      tpu.vector_store %arg8[%c0_43, %c0_44], %66 {strides = array<i32>} : memref<16x128xf32, #tpu.memory_space<vmem>>, vector<16x128xf32>,
    } else {
    }
    return
  }
  func.func @transform_0(%arg0: i32) -> (i32, i32) {
    %c0_i32 = arith.constant 0 : i32
    %c0_i32_0 = arith.constant 0 : i32
    return %c0_i32, %arg0 : i32, i32
  }
  func.func @transform_1(%arg0: i32) -> (i32, i32) {
    %c0_i32 = arith.constant 0 : i32
    %c0_i32_0 = arith.constant 0 : i32
    return %arg0, %c0_i32 : i32, i32
  }
  func.func @transform_2(%arg0: i32) -> (i32, i32) {
    %c0_i32 = arith.constant 0 : i32
    %c0_i32_0 = arith.constant 0 : i32
    return %arg0, %c0_i32 : i32, i32
  }
  func.func @transform_3(%arg0: i32) -> (i32, i32) {
    %c0_i32 = arith.constant 0 : i32
    %c0_i32_0 = arith.constant 0 : i32
    %c0_i32_1 = arith.constant 0 : i32
    return %c0_i32, %c0_i32_0 : i32, i32
  }
  func.func @transform_4(%arg0: i32) -> (i32, i32) {
    %c0_i32 = arith.constant 0 : i32
    %c0_i32_0 = arith.constant 0 : i32
    %c0_i32_1 = arith.constant 0 : i32
    return %c0_i32, %c0_i32_0 : i32, i32
  }
  func.func @transform_5(%arg0: i32) -> (i32, i32, i32) {
    %c0_i32 = arith.constant 0 : i32
    %c0_i32_0 = arith.constant 0 : i32
    %c0_i32_1 = arith.constant 0 : i32
    %c0_i32_2 = arith.constant 0 : i32
    return %c0_i32, %c0_i32_0, %c0_i32_1 : i32, i32, i32
  }
  func.func @transform_6(%arg0: i32) -> (i32, i32, i32) {
    %c0_i32 = arith.constant 0 : i32
    %c0_i32_0 = arith.constant 0 : i32
    %c0_i32_1 = arith.constant 0 : i32
    %c0_i32_2 = arith.constant 0 : i32
    return %c0_i32, %c0_i32_0, %c0_i32_1 : i32, i32, i32
  }
  func.func @transform_7(%arg0: i32) -> (i32, i32) {
    %c0_i32 = arith.constant 0 : i32
    %c0_i32_0 = arith.constant 0 : i32
    %c0_i32_1 = arith.constant 0 : i32
    return %c0_i32, %c0_i32_0 : i32, i32
  }
}

</mosaic_0001>

<llo_original>
// kernel: tpu_custom_call.1
$region0: #{tpu_custom_call.1}
  #allocation0 [shape = 'u32[]', space=smem, size = 0x4, offset = 0x4, fixed_abs, tag = 'smem constant byte address 0x4 - core index']
  #allocation1 [shape = 'u32[144,128]{1,0:T(1,128)}', space=vmem, size = 0x12000, scoped, tag = 'internal scratch']
  #allocation2 [shape = 'f32[16,128]{1,0:T(8,128)}', space=vmem, size = 0x2000, scoped, tag = 'scratch operand']
  %s0 = inlined_call_operand.vmem [shape: s32[1,384], index: 0, kind: input, shape index: {}]
  %s1 = inlined_call_operand.vmem [shape: f32[384,128], index: 1, kind: input, shape index: {}]
  %s2 = inlined_call_operand.vmem [shape: f32[384,8], index: 2, kind: input, shape index: {}]
  %s3 = inlined_call_operand.vmem [shape: f32[8,128], index: 3, kind: input, shape index: {}]
  %s4 = inlined_call_operand.hbm [shape: f32[128,128], index: 4, kind: input, shape index: {}]
  %s5 = inlined_call_operand.hbm [shape: f32[3,128,128], index: 5, kind: input, shape index: {}]
  %s6 = inlined_call_operand.vmem [shape: f32[3,1,128], index: 6, kind: input, shape index: {}]
  %s7 = inlined_call_operand.hbm [shape: f32[16,128], index: 7, kind: output, shape index: {}]
  %s8 = sld [smem:[#allocation0]]
  $region77: #{tpu_custom_call.1} parent=0
    _
  %s10 = ssub.s32 1, %s8
  %s11 = scalar_select 0, %s10, %s8
  $region1: #{tpu_custom_call.1} parent=0
    #allocation3 [shape = 'u8[65536]{0}', space=vmem, size = 0x10000, scoped, tag = 'input window, operand 4, single buffered']
    #allocation4 [shape = 's32[2]{0}', space=sflag, size = 0x8, scoped, tag = 'scoped memory for tpu_custom_call.1']
    #allocation5 [shape = 's32[2]{0}', space=sflag, size = 0x8, scoped, tag = 'scoped memory for tpu_custom_call.1']
    #allocation6 [shape = 'u8[196608]{0}', space=vmem, size = 0x30000, scoped, tag = 'input window, operand 5, single buffered']
    #allocation7 [shape = 's32[1]{0}', space=sflag, size = 0x4, scoped, tag = 'scoped memory for tpu_custom_call.1']
    #allocation8 [shape = 'u8[8192]{0}', space=vmem, size = 0x2000, scoped, tag = 'output window, operand 0, single buffered']
    %12 = vsyncpa [#allocation4], 0
    %13 = vsyncpa [#allocation7], 0
    %14 = vsyncpa [#allocation5], 0
    loop: start=0, step=1, limit=5
    $region2: #{tpu_custom_call.1} parent=1 // loop_pre_header
      _
    $region3: #{tpu_custom_call.1} parent=1 // loop_header
      %s16 = sphi 0, %s20
      %p17 = scmp.ge.s32.totalorder %s16, 5
      %s26 = sphi 0, %s28
      %s29 = sphi 0, %s26
      %s30 = sphi 0, %s29
      %s46 = sphi 0, %s30
      %s52 = sphi 0, %s54
      %s55 = sphi 0, %s52
      %s56 = sphi 0, %s55
      %s72 = sphi 0, %s56
      %s78 = sphi 0, %s80
      %s81 = sphi 0, %s78
      %s82 = sphi 0, %s81
      %s98 = sphi 0, %s82
      %s102 = sphi 0, %s102
      %s104 = sphi 0, %s102
      %s105 = sphi 0, %s104
      %s119 = sphi 0, %s105
      %s123 = sphi 0, %s123
      %s125 = sphi 0, %s123
      %s126 = sphi 0, %s125
      %s140 = sphi 0, %s126
      %s144 = sphi 0, %s144
      %s146 = sphi 0, %s144
      %s147 = sphi 0, %s146
      %s161 = sphi 0, %s147
      %s165 = sphi 0, %s165
      %s167 = sphi 0, %s165
      %s168 = sphi 0, %s167
      %s182 = sphi 0, %s168
      %s186 = sphi 0, %s186
      %s188 = sphi 0, %s186
      %s189 = sphi 0, %s188
      %s203 = sphi 0, %s189
    $region4: #{tpu_custom_call.1} parent=1 // loop_header_branch
      %19 = sbr.rel (%p17) target = $region8
    $region5: #{tpu_custom_call.1} parent=1 // loop_body
      %s21 = ssub.s32 %s16, 1
      %s22 = ssub.s32 %s16, 2
      %s23 = sadd.s32 %s16, 1
      %s24 = ssub.s32 %s16, %s23
      %p25 = scmp.eq.s32.totalorder %s24, 0
      %s27 = sadd.s32 %s26, 1
      %s28 = scalar_select %p25, %s26, %s27
      %p31 = pneg %p25
      %p32 = scmp.eq.s32.totalorder %s16, 2
      %p33 = por %p31, %p32
      %p34 = scmp.ne.s32.totalorder %s26, %s29
      %p35 = scmp.eq.s32.totalorder %s16, 0
      %p36 = por %p34, %p35
      %p37 = scmp.ne.s32.totalorder %s26, %s29
      %p38 = scmp.eq.s32.totalorder %s21, 2
      %p39 = por %p37, %p38
      %p40 = scmp.ne.s32.totalorder %s29, %s30
      %p41 = scmp.eq.s32.totalorder %s21, 0
      %p42 = por %p40, %p41
      %p43 = scmp.ne.s32.totalorder %s29, %s30
      %p44 = scmp.eq.s32.totalorder %s22, 2
      %p45 = por %p43, %p44
      %p47 = scmp.ne.s32.totalorder %s30, %s46
      %p48 = scmp.eq.s32.totalorder %s22, 0
      %p49 = por %p47, %p48
      %s50 = ssub.s32 %s16, %s23
      %p51 = scmp.eq.s32.totalorder %s50, 0
      %s53 = sadd.s32 %s52, 1
      %s54 = scalar_select %p51, %s52, %s53
      %p57 = pneg %p51
      %p58 = scmp.eq.s32.totalorder %s16, 2
      %p59 = por %p57, %p58
      %p60 = scmp.ne.s32.totalorder %s52, %s55
      %p61 = scmp.eq.s32.totalorder %s16, 0
      %p62 = por %p60, %p61
      %p63 = scmp.ne.s32.totalorder %s52, %s55
      %p64 = scmp.eq.s32.totalorder %s21, 2
      %p65 = por %p63, %p64
      %p66 = scmp.ne.s32.totalorder %s55, %s56
      %p67 = scmp.eq.s32.totalorder %s21, 0
      %p68 = por %p66, %p67
      %p69 = scmp.ne.s32.totalorder %s55, %s56
      %p70 = scmp.eq.s32.totalorder %s22, 2
      %p71 = por %p69, %p70
      %p73 = scmp.ne.s32.totalorder %s56, %s72
      %p74 = scmp.eq.s32.totalorder %s22, 0
      %p75 = por %p73, %p74
      %s76 = ssub.s32 %s16, %s23
      %p77 = scmp.eq.s32.totalorder %s76, 0
      %s79 = sadd.s32 %s78, 1
      %s80 = scalar_select %p77, %s78, %s79
      %p83 = pneg %p77
      %p84 = scmp.eq.s32.totalorder %s16, 2
      %p85 = por %p83, %p84
      %p86 = scmp.ne.s32.totalorder %s78, %s81
      %p87 = scmp.eq.s32.totalorder %s16, 0
      %p88 = por %p86, %p87
      %p89 = scmp.ne.s32.totalorder %s78, %s81
      %p90 = scmp.eq.s32.totalorder %s21, 2
      %p91 = por %p89, %p90
      %p92 = scmp.ne.s32.totalorder %s81, %s82
      %p93 = scmp.eq.s32.totalorder %s21, 0
      %p94 = por %p92, %p93
      %p95 = scmp.ne.s32.totalorder %s81, %s82
      %p96 = scmp.eq.s32.totalorder %s22, 2
      %p97 = por %p95, %p96
      %p99 = scmp.ne.s32.totalorder %s82, %s98
      %p100 = scmp.eq.s32.totalorder %s22, 0
      %p101 = por %p99, %p100
      %s103 = sadd.s32 %s102, 1
      %p106 = scmp.eq.s32.totalorder %s16, 2
      %p107 = scmp.ne.s32.totalorder %s102, %s104
      %p108 = scmp.eq.s32.totalorder %s16, 0
      %p109 = por %p107, %p108
      %p110 = scmp.ne.s32.totalorder %s102, %s104
      %p111 = scmp.eq.s32.totalorder %s21, 2
      %p112 = por %p110, %p111
      %p113 = scmp.ne.s32.totalorder %s104, %s105
      %p114 = scmp.eq.s32.totalorder %s21, 0
      %p115 = por %p113, %p114
      %p116 = scmp.ne.s32.totalorder %s104, %s105
      %p117 = scmp.eq.s32.totalorder %s22, 2
      %p118 = por %p116, %p117
      %p120 = scmp.ne.s32.totalorder %s105, %s119
      %p121 = scmp.eq.s32.totalorder %s22, 0
      %p122 = por %p120, %p121
      %s124 = sadd.s32 %s123, 1
      %p127 = scmp.eq.s32.totalorder %s16, 2
      %p128 = scmp.ne.s32.totalorder %s123, %s125
      %p129 = scmp.eq.s32.totalorder %s16, 0
      %p130 = por %p128, %p129
      %p131 = scmp.ne.s32.totalorder %s123, %s125
      %p132 = scmp.eq.s32.totalorder %s21, 2
      %p133 = por %p131, %p132
      %p134 = scmp.ne.s32.totalorder %s125, %s126
      %p135 = scmp.eq.s32.totalorder %s21, 0
      %p136 = por %p134, %p135
      %p137 = scmp.ne.s32.totalorder %s125, %s126
      %p138 = scmp.eq.s32.totalorder %s22, 2
      %p139 = por %p137, %p138
      %p141 = scmp.ne.s32.totalorder %s126, %s140
      %p142 = scmp.eq.s32.totalorder %s22, 0
      %p143 = por %p141, %p142
      %s145 = sadd.s32 %s144, 1
      %p148 = scmp.eq.s32.totalorder %s16, 2
      %p149 = scmp.ne.s32.totalorder %s144, %s146
      %p150 = scmp.eq.s32.totalorder %s16, 0
      %p151 = por %p149, %p150
      %p152 = scmp.ne.s32.totalorder %s144, %s146
      %p153 = scmp.eq.s32.totalorder %s21, 2
      %p154 = por %p152, %p153
      %p155 = scmp.ne.s32.totalorder %s146, %s147
      %p156 = scmp.eq.s32.totalorder %s21, 0
      %p157 = por %p155, %p156
      %p158 = scmp.ne.s32.totalorder %s146, %s147
      %p159 = scmp.eq.s32.totalorder %s22, 2
      %p160 = por %p158, %p159
      %p162 = scmp.ne.s32.totalorder %s147, %s161
      %p163 = scmp.eq.s32.totalorder %s22, 0
      %p164 = por %p162, %p163
      %s166 = sadd.s32 %s165, 1
      %p169 = scmp.eq.s32.totalorder %s16, 2
      %p170 = scmp.ne.s32.totalorder %s165, %s167
      %p171 = scmp.eq.s32.totalorder %s16, 0
      %p172 = por %p170, %p171
      %p173 = scmp.ne.s32.totalorder %s165, %s167
      %p174 = scmp.eq.s32.totalorder %s21, 2
      %p175 = por %p173, %p174
      %p176 = scmp.ne.s32.totalorder %s167, %s168
      %p177 = scmp.eq.s32.totalorder %s21, 0
      %p178 = por %p176, %p177
      %p179 = scmp.ne.s32.totalorder %s167, %s168
      %p180 = scmp.eq.s32.totalorder %s22, 2
      %p181 = por %p179, %p180
      %p183 = scmp.ne.s32.totalorder %s168, %s182
      %p184 = scmp.eq.s32.totalorder %s22, 0
      %p185 = por %p183, %p184
      %s187 = sadd.s32 %s186, 1
      %p190 = scmp.eq.s32.totalorder %s16, 2
      %p191 = scmp.ne.s32.totalorder %s186, %s188
      %p192 = scmp.eq.s32.totalorder %s16, 0
      %p193 = por %p191, %p192
      %p194 = scmp.ne.s32.totalorder %s186, %s188
      %p195 = scmp.eq.s32.totalorder %s21, 2
      %p196 = por %p194, %p195
      %p197 = scmp.ne.s32.totalorder %s188, %s189
      %p198 = scmp.eq.s32.totalorder %s21, 0
      %p199 = por %p197, %p198
      %p200 = scmp.ne.s32.totalorder %s188, %s189
      %p201 = scmp.eq.s32.totalorder %s22, 2
      %p202 = por %p200, %p201
      %p204 = scmp.ne.s32.totalorder %s189, %s203
      %p205 = scmp.eq.s32.totalorder %s22, 0
      %p206 = por %p204, %p205
      %p207 = scmp.le.s32.totalorder 1, %s16
      %p208 = scmp.lt.s32.totalorder %s16, 4
      %p209 = pnand %p207, %p208
      %p210 = pneg %p209
      // Predicated region
      $region9: #{tpu_custom_call.1} parent=5 // pred_check
        _
      $region10: #{tpu_custom_call.1} parent=5 // pred_check_branch
        %212 = sbr.rel (%p209) target = $region12
      $region11: #{tpu_custom_call.1} parent=5 // pred_region
        %s213 = ssub.s32 %s16, 1
        // Predicated region
        $region13: #{tpu_custom_call.1} parent=11 // pred_check
          %p214 = pneg %p115
        $region14: #{tpu_custom_call.1} parent=11 // pred_check_branch
          %216 = sbr.rel (%p214) target = $region16
        $region15: #{tpu_custom_call.1} parent=11 // pred_region
          _
        $region16: #{tpu_custom_call.1} parent=11 // pred_fallthru
          _
        // Predicated region
        $region17: #{tpu_custom_call.1} parent=11 // pred_check
          %p217 = pneg %p136
        $region18: #{tpu_custom_call.1} parent=11 // pred_check_branch
          %219 = sbr.rel (%p217) target = $region20
        $region19: #{tpu_custom_call.1} parent=11 // pred_region
          %s221 = ssub.s32 2048, 2048
          %222 = vsyncadd [#allocation4], %s221
          %s223 = sshll.u32 [#allocation3], 4
          %s224 = int_to_ptr.vmem [resolvable:$true] %s223
          %229 = dma.hbm_to_vmem [thread:$0]  %s4, 2048, %s224, [#allocation4], 128, 128, 8
        $region20: #{tpu_custom_call.1} parent=11 // pred_fallthru
          _
        // Predicated region
        $region21: #{tpu_custom_call.1} parent=11 // pred_check
          %p230 = pneg %p157
        $region22: #{tpu_custom_call.1} parent=11 // pred_check_branch
          %232 = sbr.rel (%p230) target = $region24
        $region23: #{tpu_custom_call.1} parent=11 // pred_region
          %s234 = ssub.s32 6144, 6144
          %235 = vsyncadd [#allocation7], %s234
          %s236 = sshll.u32 [#allocation6], 4
          %s237 = int_to_ptr.vmem [resolvable:$true] %s236
          %242 = dma.hbm_to_vmem [thread:$0]  %s5, 6144, %s237, [#allocation7], 128, 128, 8
        $region24: #{tpu_custom_call.1} parent=11 // pred_fallthru
          _
        // Predicated region
        $region25: #{tpu_custom_call.1} parent=11 // pred_check
          %p243 = pneg %p178
        $region26: #{tpu_custom_call.1} parent=11 // pred_check_branch
          %245 = sbr.rel (%p243) target = $region28
        $region27: #{tpu_custom_call.1} parent=11 // pred_region
          _
        $region28: #{tpu_custom_call.1} parent=11 // pred_fallthru
          _
      $region12: #{tpu_custom_call.1} parent=5 // pred_fallthru
        _
      %p246 = scmp.lt.s32.totalorder %s16, 3
      // Predicated region
      $region29: #{tpu_custom_call.1} parent=5 // pred_check
        %p247 = pneg %p246
      $region30: #{tpu_custom_call.1} parent=5 // pred_check_branch
        %249 = sbr.rel (%p247) target = $region32
      $region31: #{tpu_custom_call.1} parent=5 // pred_region
        // Predicated region
        $region33: #{tpu_custom_call.1} parent=31 // pred_check
          %p250 = pneg %p36
        $region34: #{tpu_custom_call.1} parent=31 // pred_check_branch
          %252 = sbr.rel (%p250) target = $region36
        $region35: #{tpu_custom_call.1} parent=31 // pred_region
          %p253 = scmp.lt.s32.totalorder %s16, 2
          %s254 = scalar_select %p253, %s16, 2
          %s255 = scalar_lea.vmem %s0, %s254
        $region36: #{tpu_custom_call.1} parent=31 // pred_fallthru
          _
        // Predicated region
        $region37: #{tpu_custom_call.1} parent=31 // pred_check
          %p256 = pneg %p62
        $region38: #{tpu_custom_call.1} parent=31 // pred_check_branch
          %258 = sbr.rel (%p256) target = $region40
        $region39: #{tpu_custom_call.1} parent=31 // pred_region
          %s259 = smul.u32 16, %s16
          %p260 = scmp.lt.s32.totalorder %s259, 47
          %s261 = scalar_select %p260, %s259, 47
          %s262 = smul.addr %s261, 8
          %s263 = scalar_lea.vmem %s1, %s262
          %s264 = smul.u32 16, %s16
        $region40: #{tpu_custom_call.1} parent=31 // pred_fallthru
          _
        // Predicated region
        $region41: #{tpu_custom_call.1} parent=31 // pred_check
          %p265 = pneg %p88
        $region42: #{tpu_custom_call.1} parent=31 // pred_check_branch
          %267 = sbr.rel (%p265) target = $region44
        $region43: #{tpu_custom_call.1} parent=31 // pred_region
          %s268 = smul.u32 16, %s16
          %p269 = scmp.lt.s32.totalorder %s268, 47
          %s270 = scalar_select %p269, %s268, 47
          %s271 = smul.addr %s270, 8
          %s272 = scalar_lea.vmem %s2, %s271
          %s273 = smul.u32 16, %s16
        $region44: #{tpu_custom_call.1} parent=31 // pred_fallthru
          _
      $region32: #{tpu_custom_call.1} parent=5 // pred_fallthru
        _
      %p274 = scmp.le.s32.totalorder 1, %s16
      %p275 = scmp.lt.s32.totalorder %s16, 4
      %p276 = pnand %p274, %p275
      %p277 = pneg %p276
      // Predicated region
      $region45: #{tpu_custom_call.1} parent=5 // pred_check
        _
      $region46: #{tpu_custom_call.1} parent=5 // pred_check_branch
        %279 = sbr.rel (%p276) target = $region48
      $region47: #{tpu_custom_call.1} parent=5 // pred_region
        %s280 = ssub.s32 %s16, 1
        // Predicated region
        $region49: #{tpu_custom_call.1} parent=47 // pred_check
          %p281 = pneg %p136
        $region50: #{tpu_custom_call.1} parent=47 // pred_check_branch
          %283 = sbr.rel (%p281) target = $region52
        $region51: #{tpu_custom_call.1} parent=47 // pred_region
          %284 = dma.done [#allocation4], 2048
        $region52: #{tpu_custom_call.1} parent=47 // pred_fallthru
          _
        // Predicated region
        $region53: #{tpu_custom_call.1} parent=47 // pred_check
          %p285 = pneg %p157
        $region54: #{tpu_custom_call.1} parent=47 // pred_check_branch
          %287 = sbr.rel (%p285) target = $region56
        $region55: #{tpu_custom_call.1} parent=47 // pred_region
          %288 = dma.done [#allocation7], 6144
        $region56: #{tpu_custom_call.1} parent=47 // pred_fallthru
          _
        %p289 = scmp.lt.s32.totalorder %s21, 2
        %s290 = scalar_select %p289, %s21, 2
        %s291 = scalar_lea.vmem %s0, %s290
        %p292 = pneg %p42
        %p293 = pneg %p39
        %s294 = smul.u32 16, %s21
        %p295 = scmp.lt.s32.totalorder %s294, 47
        %s296 = scalar_select %p295, %s294, 47
        %s297 = smul.addr %s296, 8
        %s298 = scalar_lea.vmem %s1, %s297
        %p299 = pneg %p68
        %p300 = pneg %p65
        %s301 = smul.u32 16, %s21
        %p302 = scmp.lt.s32.totalorder %s301, 47
        %s303 = scalar_select %p302, %s301, 47
        %s304 = smul.addr %s303, 8
        %s305 = scalar_lea.vmem %s2, %s304
        %p306 = pneg %p94
        %p307 = pneg %p91
        %p308 = pneg %p115
        %p309 = pneg %p112
        %p310 = pneg %p136
        %p311 = pneg %p133
        %p312 = pneg %p157
        %p313 = pneg %p154
        %p314 = pneg %p178
        %p315 = pneg %p175
        %p316 = pneg %p199
        %p317 = pneg %p196
        %p318 = scmp.lt.s32.totalorder %s21, 2
        %s319 = scalar_select %p318, %s21, 2
        %s320 = scalar_lea.vmem %s0, %s319
        %s321 = smul.u32 16, %s21
        %p322 = scmp.lt.s32.totalorder %s321, 47
        %s323 = scalar_select %p322, %s321, 47
        %s324 = smul.addr %s323, 8
        %s325 = scalar_lea.vmem %s1, %s324
        %s326 = smul.u32 16, %s21
        %s327 = smul.u32 16, %s21
        %p328 = scmp.lt.s32.totalorder %s327, 47
        %s329 = scalar_select %p328, %s327, 47
        %s330 = smul.addr %s329, 8
        %s331 = scalar_lea.vmem %s2, %s330
        %s332 = smul.u32 16, %s21
        %p333 = scmp.eq.s32.totalorder %s21, 0
        // Predicated region
        $region57: #{tpu_custom_call.1} parent=47 // pred_check
          %p334 = pneg %p333
        $region58: #{tpu_custom_call.1} parent=47 // pred_check_branch
          %336 = sbr.rel (%p334) target = $region60
        $region59: #{tpu_custom_call.1} parent=47 // pred_region
          %337 = vst [vmem:[#allocation2] sm:$0xff] 0.0
          %338 = vst [vmem:[#allocation2 + $0x8] sm:$0xff] 0.0
        $region60: #{tpu_custom_call.1} parent=47 // pred_fallthru
          _
        %v339 = vld [vmem:[%s320] sm:$0x1]
        %v340 = vld [vmem:[%s325] sm:$0xff]
        %v341 = vld [vmem:[%s325 + $0x8] sm:$0xff]
        %v342 = vld [vmem:[%s325 + $0x10] sm:$0xff]
        %v343 = vld [vmem:[%s325 + $0x18] sm:$0xff]
        %v344 = vld [vmem:[%s325 + $0x20] sm:$0xff]
        %v345 = vld [vmem:[%s325 + $0x28] sm:$0xff]
        %v346 = vld [vmem:[%s325 + $0x30] sm:$0xff]
        %v347 = vld [vmem:[%s325 + $0x38] sm:$0xff]
        %v348 = vld [vmem:[%s325 + $0x40] sm:$0xff]
        %v349 = vld [vmem:[%s325 + $0x48] sm:$0xff]
        %v350 = vld [vmem:[%s325 + $0x50] sm:$0xff]
        %v351 = vld [vmem:[%s325 + $0x58] sm:$0xff]
        %v352 = vld [vmem:[%s325 + $0x60] sm:$0xff]
        %v353 = vld [vmem:[%s325 + $0x68] sm:$0xff]
        %v354 = vld [vmem:[%s325 + $0x70] sm:$0xff]
        %v355 = vld [vmem:[%s325 + $0x78] sm:$0xff]
        %v356 = vld [vmem:[%s331] sm:$0xff]
        %v357 = vld [vmem:[%s331 + $0x8] sm:$0xff]
        %v358 = vld [vmem:[%s331 + $0x10] sm:$0xff]
        %v359 = vld [vmem:[%s331 + $0x18] sm:$0xff]
        %v360 = vld [vmem:[%s331 + $0x20] sm:$0xff]
        %v361 = vld [vmem:[%s331 + $0x28] sm:$0xff]
        %v362 = vld [vmem:[%s331 + $0x30] sm:$0xff]
        %v363 = vld [vmem:[%s331 + $0x38] sm:$0xff]
        %v364 = vld [vmem:[%s331 + $0x40] sm:$0xff]
        %v365 = vld [vmem:[%s331 + $0x48] sm:$0xff]
        %v366 = vld [vmem:[%s331 + $0x50] sm:$0xff]
        %v367 = vld [vmem:[%s331 + $0x58] sm:$0xff]
        %v368 = vld [vmem:[%s331 + $0x60] sm:$0xff]
        %v369 = vld [vmem:[%s331 + $0x68] sm:$0xff]
        %v370 = vld [vmem:[%s331 + $0x70] sm:$0xff]
        %v371 = vld [vmem:[%s331 + $0x78] sm:$0xff]
        %v372 = vld [vmem:[%s3] sm:$0xff]
        %vm373 = vcmask 64512
        %v375 = vsel %vm373, %v356, 0
        %v378 = vsel %vm373, %v357, 0
        %v381 = vsel %vm373, %v358, 0
        %v384 = vsel %vm373, %v359, 0
        %v387 = vsel %vm373, %v360, 0
        %v390 = vsel %vm373, %v361, 0
        %v393 = vsel %vm373, %v362, 0
        %v396 = vsel %vm373, %v363, 0
        %v399 = vsel %vm373, %v364, 0
        %v402 = vsel %vm373, %v365, 0
        %v405 = vsel %vm373, %v366, 0
        %v408 = vsel %vm373, %v367, 0
        %v411 = vsel %vm373, %v368, 0
        %v414 = vsel %vm373, %v369, 0
        %v417 = vsel %vm373, %v370, 0
        %v420 = vsel %vm373, %v371, 0
        %422 = vmatprep.subr.mxu0 0.0
        %423 = vmatpush1.msra.mxu0 %v372
        %424 = vmatprep.subr.mxu0 0.0
        %425 = vmatpush1.msra.mxu0 0.0
        %426 = vmatprep.subr.mxu0 0.0
        %427 = vmatpush1.msra.mxu0 0.0
        %428 = vmatprep.subr.mxu0 0.0
        %429 = vmatpush1.msra.mxu0 0.0
        %430 = vmatprep.subr.mxu0 0.0
        %431 = vmatpush1.msra.mxu0 0.0
        %432 = vmatprep.subr.mxu0 0.0
        %433 = vmatpush1.msra.mxu0 0.0
        %434 = vmatprep.subr.mxu0 0.0
        %435 = vmatpush1.msra.mxu0 0.0
        %436 = vmatprep.subr.mxu0 0.0
        %437 = vmatpush1.msra.mxu0 0.0
        %438 = vmatprep.subr.mxu0 0.0
        %439 = vmatpush1.msra.mxu0 0.0
        %440 = vmatprep.subr.mxu0 0.0
        %441 = vmatpush1.msra.mxu0 0.0
        %442 = vmatprep.subr.mxu0 0.0
        %443 = vmatpush1.msra.mxu0 0.0
        %444 = vmatprep.subr.mxu0 0.0
        %445 = vmatpush1.msra.mxu0 0.0
        %446 = vmatprep.subr.mxu0 0.0
        %447 = vmatpush1.msra.mxu0 0.0
        %448 = vmatprep.subr.mxu0 0.0
        %449 = vmatpush1.msra.mxu0 0.0
        %450 = vmatprep.subr.mxu0 0.0
        %451 = vmatpush1.msra.mxu0 0.0
        %452 = vmatprep.subr.mxu0 0.0
        %453 = vmatpush1.msra.mxu0 0.0
        %454 = vmatprep.subr.mxu0 0.0
        %455 = vmatpush1.msra.mxu0 0.0
        %456 = vmatprep.subr.mxu0 0.0
        %457 = vmatpush1.msra.mxu0 0.0
        %458 = vmatprep.subr.mxu0 0.0
        %459 = vmatpush1.msra.mxu0 0.0
        %460 = vmatprep.subr.mxu0 0.0
        %461 = vmatpush1.msra.mxu0 0.0
        %462 = vmatprep.subr.mxu0 0.0
        %463 = vmatpush1.msra.mxu0 0.0
        %464 = vmatprep.subr.mxu0 0.0
        %465 = vmatpush1.msra.mxu0 0.0
        %466 = vmatprep.subr.mxu0 0.0
        %467 = vmatpush1.msra.mxu0 0.0
        %468 = vmatprep.subr.mxu0 0.0
        %469 = vmatpush1.msra.mxu0 0.0
        %470 = vmatprep.subr.mxu0 0.0
        %471 = vmatpush1.msra.mxu0 0.0
        %472 = vmatprep.subr.mxu0 0.0
        %473 = vmatpush1.msra.mxu0 0.0
        %474 = vmatprep.subr.mxu0 0.0
        %475 = vmatpush1.msra.mxu0 0.0
        %476 = vmatprep.subr.mxu0 0.0
        %477 = vmatpush1.msra.mxu0 0.0
        %478 = vmatprep.subr.mxu0 0.0
        %479 = vmatpush1.msra.mxu0 0.0
        %480 = vmatprep.subr.mxu0 0.0
        %481 = vmatpush1.msra.mxu0 0.0
        %482 = vmatprep.subr.mxu0 0.0
        %483 = vmatpush1.msra.mxu0 0.0
        %484 = vmatprep.subr.mxu0 0.0
        %485 = vmatpush1.msra.mxu0 0.0
        %486 = vmatprep.mubr.f32.mxu0 0.0
        %487 = vmatmul.mubr.f32.gmra.mrb[0].mxu0 %v375
        %v488 = vpop.f32.mrb[0].mxu0
        %v489 = vadd.f32 0.0, %v488
        %v490 = vpop.f32.mrb[0].mxu0
        %491 = vmatprep.mubr.f32.mxu0 0.0
        %492 = vmatmul.mubr.f32.gmra.mrb[0].mxu0 %v378
        %v493 = vpop.f32.mrb[0].mxu0
        %v494 = vadd.f32 0.0, %v493
        %v495 = vpop.f32.mrb[0].mxu0
        %496 = vmatprep.mubr.f32.mxu0 0.0
        %497 = vmatmul.mubr.f32.gmra.mrb[0].mxu0 %v381
        %v498 = vpop.f32.mrb[0].mxu0
        %v499 = vadd.f32 0.0, %v498
        %v500 = vpop.f32.mrb[0].mxu0
        %501 = vmatprep.mubr.f32.mxu0 0.0
        %502 = vmatmul.mubr.f32.gmra.mrb[0].mxu0 %v384
        %v503 = vpop.f32.mrb[0].mxu0
        %v504 = vadd.f32 0.0, %v503
        %v505 = vpop.f32.mrb[0].mxu0
        %506 = vmatprep.mubr.f32.mxu0 0.0
        %507 = vmatmul.mubr.f32.gmra.mrb[0].mxu0 %v387
        %v508 = vpop.f32.mrb[0].mxu0
        %v509 = vadd.f32 0.0, %v508
        %v510 = vpop.f32.mrb[0].mxu0
        %511 = vmatprep.mubr.f32.mxu0 0.0
        %512 = vmatmul.mubr.f32.gmra.mrb[0].mxu0 %v390
        %v513 = vpop.f32.mrb[0].mxu0
        %v514 = vadd.f32 0.0, %v513
        %v515 = vpop.f32.mrb[0].mxu0
        %516 = vmatprep.mubr.f32.mxu0 0.0
        %517 = vmatmul.mubr.f32.gmra.mrb[0].mxu0 %v393
        %v518 = vpop.f32.mrb[0].mxu0
        %v519 = vadd.f32 0.0, %v518
        %v520 = vpop.f32.mrb[0].mxu0
        %521 = vmatprep.mubr.f32.mxu0 0.0
        %522 = vmatmul.mubr.f32.gmra.mrb[0].mxu0 %v396
        %v523 = vpop.f32.mrb[0].mxu0
        %v524 = vadd.f32 0.0, %v523
        %v525 = vpop.f32.mrb[0].mxu0
        %526 = vmatprep.mubr.f32.mxu0 0.0
        %527 = vmatmul.mubr.f32.gmra.mrb[0].mxu0 %v399
        %v528 = vpop.f32.mrb[0].mxu0
        %v529 = vadd.f32 0.0, %v528
        %v530 = vpop.f32.mrb[0].mxu0
        %531 = vmatprep.mubr.f32.mxu0 0.0
        %532 = vmatmul.mubr.f32.gmra.mrb[0].mxu0 %v402
        %v533 = vpop.f32.mrb[0].mxu0
        %v534 = vadd.f32 0.0, %v533
        %v535 = vpop.f32.mrb[0].mxu0
        %536 = vmatprep.mubr.f32.mxu0 0.0
        %537 = vmatmul.mubr.f32.gmra.mrb[0].mxu0 %v405
        %v538 = vpop.f32.mrb[0].mxu0
        %v539 = vadd.f32 0.0, %v538
        %v540 = vpop.f32.mrb[0].mxu0
        %541 = vmatprep.mubr.f32.mxu0 0.0
        %542 = vmatmul.mubr.f32.gmra.mrb[0].mxu0 %v408
        %v543 = vpop.f32.mrb[0].mxu0
        %v544 = vadd.f32 0.0, %v543
        %v545 = vpop.f32.mrb[0].mxu0
        %546 = vmatprep.mubr.f32.mxu0 0.0
        %547 = vmatmul.mubr.f32.gmra.mrb[0].mxu0 %v411
        %v548 = vpop.f32.mrb[0].mxu0
        %v549 = vadd.f32 0.0, %v548
        %v550 = vpop.f32.mrb[0].mxu0
        %551 = vmatprep.mubr.f32.mxu0 0.0
        %552 = vmatmul.mubr.f32.gmra.mrb[0].mxu0 %v414
        %v553 = vpop.f32.mrb[0].mxu0
        %v554 = vadd.f32 0.0, %v553
        %v555 = vpop.f32.mrb[0].mxu0
        %556 = vmatprep.mubr.f32.mxu0 0.0
        %557 = vmatmul.mubr.f32.gmra.mrb[0].mxu0 %v417
        %v558 = vpop.f32.mrb[0].mxu0
        %v559 = vadd.f32 0.0, %v558
        %v560 = vpop.f32.mrb[0].mxu0
        %561 = vmatprep.mubr.f32.mxu0 0.0
        %562 = vmatmul.mubr.f32.gmra.mrb[0].mxu0 %v420
        %v563 = vpop.f32.mrb[0].mxu0
        %v564 = vadd.f32 0.0, %v563
        %v565 = vpop.f32.mrb[0].mxu0
        %566 = vdwg.mxu0
        %v567 = vmul.f32 %v489, %v340
        %v568 = vmul.f32 %v494, %v341
        %v569 = vmul.f32 %v499, %v342
        %v570 = vmul.f32 %v504, %v343
        %v571 = vmul.f32 %v509, %v344
        %v572 = vmul.f32 %v514, %v345
        %v573 = vmul.f32 %v519, %v346
        %v574 = vmul.f32 %v524, %v347
        %v575 = vmul.f32 %v529, %v348
        %v576 = vmul.f32 %v534, %v349
        %v577 = vmul.f32 %v539, %v350
        %v578 = vmul.f32 %v544, %v351
        %v579 = vmul.f32 %v549, %v352
        %v580 = vmul.f32 %v554, %v353
        %v581 = vmul.f32 %v559, %v354
        %v582 = vmul.f32 %v564, %v355
        %v583 = vlaneseq
        %v584 = vshrl.u32 %v583, 7
        %v585 = vadd.s32 %v584, 8
        %v586 = vlaneseq
        %v587 = vshrl.u32 %v586, 7
        %v588 = vsub.s32 0, %v587
        %v589 = vrot.slane %v339, %v588
        %vm590 = vcmp.eq.s32.totalorder %v584, %v589
        %vm591 = vcmp.eq.s32.totalorder %v585, %v589
        %v592 = vsel %vm590, 1, 0
        %v593 = vsel %vm591, 1, 0
        %v594 = vcvt.s32.f32 %v592
        %v595 = vcvt.s32.f32 %v593
        %v596 = vld [vmem:[#allocation2] sm:$0xff]
        %v597 = vld [vmem:[#allocation2 + $0x8] sm:$0xff]
        %598 = vmatprep.subr.mxu0 0.0
        %599 = vmatpush1.msra.mxu0 %v567
        %600 = vmatprep.subr.mxu0 0.0
        %601 = vmatpush1.msra.mxu0 %v568
        %602 = vmatprep.subr.mxu0 0.0
        %603 = vmatpush1.msra.mxu0 %v569
        %604 = vmatprep.subr.mxu0 0.0
        %605 = vmatpush1.msra.mxu0 %v570
        %606 = vmatprep.subr.mxu0 0.0
        %607 = vmatpush1.msra.mxu0 %v571
        %608 = vmatprep.subr.mxu0 0.0
        %609 = vmatpush1.msra.mxu0 %v572
        %610 = vmatprep.subr.mxu0 0.0
        %611 = vmatpush1.msra.mxu0 %v573
        %612 = vmatprep.subr.mxu0 0.0
        %613 = vmatpush1.msra.mxu0 %v574
        %614 = vmatprep.subr.mxu0 0.0
        %615 = vmatpush1.msra.mxu0 %v575
        %616 = vmatprep.subr.mxu0 0.0
        %617 = vmatpush1.msra.mxu0 %v576
        %618 = vmatprep.subr.mxu0 0.0
        %619 = vmatpush1.msra.mxu0 %v577
        %620 = vmatprep.subr.mxu0 0.0
        %621 = vmatpush1.msra.mxu0 %v578
        %622 = vmatprep.subr.mxu0 0.0
        %623 = vmatpush1.msra.mxu0 %v579
        %624 = vmatprep.subr.mxu0 0.0
        %625 = vmatpush1.msra.mxu0 %v580
        %626 = vmatprep.subr.mxu0 0.0
        %627 = vmatpush1.msra.mxu0 %v581
        %628 = vmatprep.subr.mxu0 0.0
        %629 = vmatpush1.msra.mxu0 %v582
        %630 = vmatprep.subr.mxu0 0.0
        %631 = vmatpush1.msra.mxu0 0.0
        %632 = vmatprep.subr.mxu0 0.0
        %633 = vmatpush1.msra.mxu0 0.0
        %634 = vmatprep.subr.mxu0 0.0
        %635 = vmatpush1.msra.mxu0 0.0
        %636 = vmatprep.subr.mxu0 0.0
        %637 = vmatpush1.msra.mxu0 0.0
        %638 = vmatprep.subr.mxu0 0.0
        %639 = vmatpush1.msra.mxu0 0.0
        %640 = vmatprep.subr.mxu0 0.0
        %641 = vmatpush1.msra.mxu0 0.0
        %642 = vmatprep.subr.mxu0 0.0
        %643 = vmatpush1.msra.mxu0 0.0
        %644 = vmatprep.subr.mxu0 0.0
        %645 = vmatpush1.msra.mxu0 0.0
        %646 = vmatprep.subr.mxu0 0.0
        %647 = vmatpush1.msra.mxu0 0.0
        %648 = vmatprep.subr.mxu0 0.0
        %649 = vmatpush1.msra.mxu0 0.0
        %650 = vmatprep.subr.mxu0 0.0
        %651 = vmatpush1.msra.mxu0 0.0
        %652 = vmatprep.subr.mxu0 0.0
        %653 = vmatpush1.msra.mxu0 0.0
        %654 = vmatprep.subr.mxu0 0.0
        %655 = vmatpush1.msra.mxu0 0.0
        %656 = vmatprep.subr.mxu0 0.0
        %657 = vmatpush1.msra.mxu0 0.0
        %658 = vmatprep.subr.mxu0 0.0
        %659 = vmatpush1.msra.mxu0 0.0
        %660 = vmatprep.subr.mxu0 0.0
        %661 = vmatpush1.msra.mxu0 0.0
        %662 = vmatprep.mubr.f32.mxu0 0.0
        %663 = vmatmul.mubr.f32.gmra.mrb[0].mxu0 %v594
        %v664 = vpop.f32.mrb[0].mxu0
        %v665 = vadd.f32 0.0, %v664
        %v666 = vpop.f32.mrb[0].mxu0
        %667 = vmatprep.mubr.f32.mxu0 0.0
        %668 = vmatmul.mubr.f32.gmra.mrb[0].mxu0 %v595
        %v669 = vpop.f32.mrb[0].mxu0
        %v670 = vadd.f32 0.0, %v669
        %v671 = vpop.f32.mrb[0].mxu0
        %672 = vdwg.mxu0
        %v673 = vadd.f32 %v596, %v665
        %v674 = vadd.f32 %v597, %v670
        %675 = vst [vmem:[#allocation2] sm:$0xff] %v673
        %676 = vst [vmem:[#allocation2 + $0x8] sm:$0xff] %v674
        %p677 = scmp.eq.s32.totalorder %s21, 2
        // Predicated region
        $region61: #{tpu_custom_call.1} parent=47 // pred_check
          %p678 = pneg %p677
        $region62: #{tpu_custom_call.1} parent=47 // pred_check_branch
          %680 = sbr.rel (%p678) target = $region64
        $region63: #{tpu_custom_call.1} parent=47 // pred_region
          %v681 = vld [vmem:[#allocation2] sm:$0xff]
          %v682 = vld [vmem:[#allocation2 + $0x8] sm:$0xff]
          %v683 = vld [vmem:[#allocation3] sm:$0xff]
          %v684 = vld [vmem:[#allocation3 + $0x8] sm:$0xff]
          %v685 = vld [vmem:[#allocation3 + $0x10] sm:$0xff]
          %v686 = vld [vmem:[#allocation3 + $0x18] sm:$0xff]
          %v687 = vld [vmem:[#allocation3 + $0x20] sm:$0xff]
          %v688 = vld [vmem:[#allocation3 + $0x28] sm:$0xff]
          %v689 = vld [vmem:[#allocation3 + $0x30] sm:$0xff]
          %v690 = vld [vmem:[#allocation3 + $0x38] sm:$0xff]
          %v691 = vld [vmem:[#allocation3 + $0x40] sm:$0xff]
          %v692 = vld [vmem:[#allocation3 + $0x48] sm:$0xff]
          %v693 = vld [vmem:[#allocation3 + $0x50] sm:$0xff]
          %v694 = vld [vmem:[#allocation3 + $0x58] sm:$0xff]
          %v695 = vld [vmem:[#allocation3 + $0x60] sm:$0xff]
          %v696 = vld [vmem:[#allocation3 + $0x68] sm:$0xff]
          %v697 = vld [vmem:[#allocation3 + $0x70] sm:$0xff]
          %v698 = vld [vmem:[#allocation3 + $0x78] sm:$0xff]
          %699 = vmatprep.subr.mxu0 0.0
          %700 = vmatpush1.msra.mxu0 %v683
          %701 = vmatprep.subr.mxu0 0.0
          %702 = vmatpush1.msra.mxu0 %v684
          %703 = vmatprep.subr.mxu0 0.0
          %704 = vmatpush1.msra.mxu0 %v685
          %705 = vmatprep.subr.mxu0 0.0
          %706 = vmatpush1.msra.mxu0 %v686
          %707 = vmatprep.subr.mxu0 0.0
          %708 = vmatpush1.msra.mxu0 %v687
          %709 = vmatprep.subr.mxu0 0.0
          %710 = vmatpush1.msra.mxu0 %v688
          %711 = vmatprep.subr.mxu0 0.0
          %712 = vmatpush1.msra.mxu0 %v689
          %713 = vmatprep.subr.mxu0 0.0
          %714 = vmatpush1.msra.mxu0 %v690
          %715 = vmatprep.subr.mxu0 0.0
          %716 = vmatpush1.msra.mxu0 %v691
          %717 = vmatprep.subr.mxu0 0.0
          %718 = vmatpush1.msra.mxu0 %v692
          %719 = vmatprep.subr.mxu0 0.0
          %720 = vmatpush1.msra.mxu0 %v693
          %721 = vmatprep.subr.mxu0 0.0
          %722 = vmatpush1.msra.mxu0 %v694
          %723 = vmatprep.subr.mxu0 0.0
          %724 = vmatpush1.msra.mxu0 %v695
          %725 = vmatprep.subr.mxu0 0.0
          %726 = vmatpush1.msra.mxu0 %v696
          %727 = vmatprep.subr.mxu0 0.0
          %728 = vmatpush1.msra.mxu0 %v697
          %729 = vmatprep.subr.mxu0 0.0
          %730 = vmatpush1.msra.mxu0 %v698
          %731 = vmatprep.subr.mxu0 0.0
          %732 = vmatpush1.msra.mxu0 0.0
          %733 = vmatprep.subr.mxu0 0.0
          %734 = vmatpush1.msra.mxu0 0.0
          %735 = vmatprep.subr.mxu0 0.0
          %736 = vmatpush1.msra.mxu0 0.0
          %737 = vmatprep.subr.mxu0 0.0
          %738 = vmatpush1.msra.mxu0 0.0
          %739 = vmatprep.subr.mxu0 0.0
          %740 = vmatpush1.msra.mxu0 0.0
          %741 = vmatprep.subr.mxu0 0.0
          %742 = vmatpush1.msra.mxu0 0.0
          %743 = vmatprep.subr.mxu0 0.0
          %744 = vmatpush1.msra.mxu0 0.0
          %745 = vmatprep.subr.mxu0 0.0
          %746 = vmatpush1.msra.mxu0 0.0
          %747 = vmatprep.subr.mxu0 0.0
          %748 = vmatpush1.msra.mxu0 0.0
          %749 = vmatprep.subr.mxu0 0.0
          %750 = vmatpush1.msra.mxu0 0.0
          %751 = vmatprep.subr.mxu0 0.0
          %752 = vmatpush1.msra.mxu0 0.0
          %753 = vmatprep.subr.mxu0 0.0
          %754 = vmatpush1.msra.mxu0 0.0
          %755 = vmatprep.subr.mxu0 0.0
          %756 = vmatpush1.msra.mxu0 0.0
          %757 = vmatprep.subr.mxu0 0.0
          %758 = vmatpush1.msra.mxu0 0.0
          %759 = vmatprep.subr.mxu0 0.0
          %760 = vmatpush1.msra.mxu0 0.0
          %761 = vmatprep.subr.mxu0 0.0
          %762 = vmatpush1.msra.mxu0 0.0
          %763 = vmatprep.mubr.f32.mxu0 0.0
          %764 = vmatmul.mubr.f32.gmra.mrb[0].mxu0 %v681
          %v765 = vpop.f32.mrb[0].mxu0
          %v766 = vadd.f32 0.0, %v765
          %v767 = vpop.f32.mrb[0].mxu0
          %768 = vmatprep.mubr.f32.mxu0 0.0
          %769 = vmatmul.mubr.f32.gmra.mrb[0].mxu0 %v682
          %v770 = vpop.f32.mrb[0].mxu0
          %v771 = vadd.f32 0.0, %v770
          %v772 = vpop.f32.mrb[0].mxu0
          %773 = vdwg.mxu0
          %v774 = vld [vmem:[#allocation6] sm:$0xff]
          %v775 = vld [vmem:[#allocation6 + $0x8] sm:$0xff]
          %v776 = vld [vmem:[#allocation6 + $0x10] sm:$0xff]
          %v777 = vld [vmem:[#allocation6 + $0x18] sm:$0xff]
          %v778 = vld [vmem:[#allocation6 + $0x20] sm:$0xff]
          %v779 = vld [vmem:[#allocation6 + $0x28] sm:$0xff]
          %v780 = vld [vmem:[#allocation6 + $0x30] sm:$0xff]
          %v781 = vld [vmem:[#allocation6 + $0x38] sm:$0xff]
          %v782 = vld [vmem:[#allocation6 + $0x40] sm:$0xff]
          %v783 = vld [vmem:[#allocation6 + $0x48] sm:$0xff]
          %v784 = vld [vmem:[#allocation6 + $0x50] sm:$0xff]
          %v785 = vld [vmem:[#allocation6 + $0x58] sm:$0xff]
          %v786 = vld [vmem:[#allocation6 + $0x60] sm:$0xff]
          %v787 = vld [vmem:[#allocation6 + $0x68] sm:$0xff]
          %v788 = vld [vmem:[#allocation6 + $0x70] sm:$0xff]
          %v789 = vld [vmem:[#allocation6 + $0x78] sm:$0xff]
          %v790 = vld [vmem:[%s6] sm:$0x1]
          %v792 = vlaneseq
          %v793 = vshrl.u32 %v792, 7
          %v794 = vsub.s32 0, %v793
          %v795 = vrot.slane %v790, %v794
          %797 = vmatprep.subr.mxu0 0.0
          %798 = vmatpush1.msra.mxu0 %v774
          %799 = vmatprep.subr.mxu0 0.0
          %800 = vmatpush1.msra.mxu0 %v775
          %801 = vmatprep.subr.mxu0 0.0
          %802 = vmatpush1.msra.mxu0 %v776
          %803 = vmatprep.subr.mxu0 0.0
          %804 = vmatpush1.msra.mxu0 %v777
          %805 = vmatprep.subr.mxu0 0.0
          %806 = vmatpush1.msra.mxu0 %v778
          %807 = vmatprep.subr.mxu0 0.0
          %808 = vmatpush1.msra.mxu0 %v779
          %809 = vmatprep.subr.mxu0 0.0
          %810 = vmatpush1.msra.mxu0 %v780
          %811 = vmatprep.subr.mxu0 0.0
          %812 = vmatpush1.msra.mxu0 %v781
          %813 = vmatprep.subr.mxu0 0.0
          %814 = vmatpush1.msra.mxu0 %v782
          %815 = vmatprep.subr.mxu0 0.0
          %816 = vmatpush1.msra.mxu0 %v783
          %817 = vmatprep.subr.mxu0 0.0
          %818 = vmatpush1.msra.mxu0 %v784
          %819 = vmatprep.subr.mxu0 0.0
          %820 = vmatpush1.msra.mxu0 %v785
          %821 = vmatprep.subr.mxu0 0.0
          %822 = vmatpush1.msra.mxu0 %v786
          %823 = vmatprep.subr.mxu0 0.0
          %824 = vmatpush1.msra.mxu0 %v787
          %825 = vmatprep.subr.mxu0 0.0
          %826 = vmatpush1.msra.mxu0 %v788
          %827 = vmatprep.subr.mxu0 0.0
          %828 = vmatpush1.msra.mxu0 %v789
          %829 = vmatprep.subr.mxu0 0.0
          %830 = vmatpush1.msra.mxu0 0.0
          %831 = vmatprep.subr.mxu0 0.0
          %832 = vmatpush1.msra.mxu0 0.0
          %833 = vmatprep.subr.mxu0 0.0
          %834 = vmatpush1.msra.mxu0 0.0
          %835 = vmatprep.subr.mxu0 0.0
          %836 = vmatpush1.msra.mxu0 0.0
          %837 = vmatprep.subr.mxu0 0.0
          %838 = vmatpush1.msra.mxu0 0.0
          %839 = vmatprep.subr.mxu0 0.0
          %840 = vmatpush1.msra.mxu0 0.0
          %841 = vmatprep.subr.mxu0 0.0
          %842 = vmatpush1.msra.mxu0 0.0
          %843 = vmatprep.subr.mxu0 0.0
          %844 = vmatpush1.msra.mxu0 0.0
          %845 = vmatprep.subr.mxu0 0.0
          %846 = vmatpush1.msra.mxu0 0.0
          %847 = vmatprep.subr.mxu0 0.0
          %848 = vmatpush1.msra.mxu0 0.0
          %849 = vmatprep.subr.mxu0 0.0
          %850 = vmatpush1.msra.mxu0 0.0
          %851 = vmatprep.subr.mxu0 0.0
          %852 = vmatpush1.msra.mxu0 0.0
          %853 = vmatprep.subr.mxu0 0.0
          %854 = vmatpush1.msra.mxu0 0.0
          %855 = vmatprep.subr.mxu0 0.0
          %856 = vmatpush1.msra.mxu0 0.0
          %857 = vmatprep.subr.mxu0 0.0
          %858 = vmatpush1.msra.mxu0 0.0
          %859 = vmatprep.subr.mxu0 0.0
          %860 = vmatpush1.msra.mxu0 0.0
          %861 = vmatprep.mubr.f32.mxu0 0.0
          %862 = vmatmul.mubr.f32.gmra.mrb[0].mxu0 %v766
          %v863 = vpop.f32.mrb[0].mxu0
          %v864 = vadd.f32 %v795, %v863
          %v865 = vpop.f32.mrb[0].mxu0
          %866 = vmatprep.mubr.f32.mxu0 0.0
          %867 = vmatmul.mubr.f32.gmra.mrb[0].mxu0 %v771
          %v868 = vpop.f32.mrb[0].mxu0
          %v869 = vadd.f32 %v795, %v868
          %v870 = vpop.f32.mrb[0].mxu0
          %871 = vdwg.mxu0
          %v872 = vxor.u32 %v864, 2147483648
          %v873 = vxor.u32 %v869, 2147483648
          %v874 = vmul.f32 %v872, 1.442695
          %v875 = vpow.pop %v874
          %v876 = vmul.f32 %v873, 1.442695
          %v877 = vpow.pop %v876
          %v878 = vadd.f32 %v875, 1.0
          %v879 = vadd.f32 %v877, 1.0
          %v880 = vrcp.pop %v878
          %v881 = vmul.f32 1.0, %v880
          %v882 = vrcp.pop %v879
          %v883 = vmul.f32 1.0, %v882
          %v884 = vmul.f32 %v864, %v881
          %v885 = vmul.f32 %v869, %v883
          %s886 = scalar_lea.vmem [#allocation6], 128
          %v887 = vld [vmem:[%s886] sm:$0xff]
          %v888 = vld [vmem:[%s886 + $0x8] sm:$0xff]
          %v889 = vld [vmem:[%s886 + $0x10] sm:$0xff]
          %v890 = vld [vmem:[%s886 + $0x18] sm:$0xff]
          %v891 = vld [vmem:[%s886 + $0x20] sm:$0xff]
          %v892 = vld [vmem:[%s886 + $0x28] sm:$0xff]
          %v893 = vld [vmem:[%s886 + $0x30] sm:$0xff]
          %v894 = vld [vmem:[%s886 + $0x38] sm:$0xff]
          %v895 = vld [vmem:[%s886 + $0x40] sm:$0xff]
          %v896 = vld [vmem:[%s886 + $0x48] sm:$0xff]
          %v897 = vld [vmem:[%s886 + $0x50] sm:$0xff]
          %v898 = vld [vmem:[%s886 + $0x58] sm:$0xff]
          %v899 = vld [vmem:[%s886 + $0x60] sm:$0xff]
          %v900 = vld [vmem:[%s886 + $0x68] sm:$0xff]
          %v901 = vld [vmem:[%s886 + $0x70] sm:$0xff]
          %v902 = vld [vmem:[%s886 + $0x78] sm:$0xff]
          %s903 = scalar_lea.vmem %s6, 1
          %v904 = vld [vmem:[%s903] sm:$0x1]
          %v906 = vlaneseq
          %v907 = vshrl.u32 %v906, 7
          %v908 = vsub.s32 0, %v907
          %v909 = vrot.slane %v904, %v908
          %911 = vmatprep.subr.mxu0 0.0
          %912 = vmatpush1.msra.mxu0 %v887
          %913 = vmatprep.subr.mxu0 0.0
          %914 = vmatpush1.msra.mxu0 %v888
          %915 = vmatprep.subr.mxu0 0.0
          %916 = vmatpush1.msra.mxu0 %v889
          %917 = vmatprep.subr.mxu0 0.0
          %918 = vmatpush1.msra.mxu0 %v890
          %919 = vmatprep.subr.mxu0 0.0
          %920 = vmatpush1.msra.mxu0 %v891
          %921 = vmatprep.subr.mxu0 0.0
          %922 = vmatpush1.msra.mxu0 %v892
          %923 = vmatprep.subr.mxu0 0.0
          %924 = vmatpush1.msra.mxu0 %v893
          %925 = vmatprep.subr.mxu0 0.0
          %926 = vmatpush1.msra.mxu0 %v894
          %927 = vmatprep.subr.mxu0 0.0
          %928 = vmatpush1.msra.mxu0 %v895
          %929 = vmatprep.subr.mxu0 0.0
          %930 = vmatpush1.msra.mxu0 %v896
          %931 = vmatprep.subr.mxu0 0.0
          %932 = vmatpush1.msra.mxu0 %v897
          %933 = vmatprep.subr.mxu0 0.0
          %934 = vmatpush1.msra.mxu0 %v898
          %935 = vmatprep.subr.mxu0 0.0
          %936 = vmatpush1.msra.mxu0 %v899
          %937 = vmatprep.subr.mxu0 0.0
          %938 = vmatpush1.msra.mxu0 %v900
          %939 = vmatprep.subr.mxu0 0.0
          %940 = vmatpush1.msra.mxu0 %v901
          %941 = vmatprep.subr.mxu0 0.0
          %942 = vmatpush1.msra.mxu0 %v902
          %943 = vmatprep.subr.mxu0 0.0
          %944 = vmatpush1.msra.mxu0 0.0
          %945 = vmatprep.subr.mxu0 0.0
          %946 = vmatpush1.msra.mxu0 0.0
          %947 = vmatprep.subr.mxu0 0.0
          %948 = vmatpush1.msra.mxu0 0.0
          %949 = vmatprep.subr.mxu0 0.0
          %950 = vmatpush1.msra.mxu0 0.0
          %951 = vmatprep.subr.mxu0 0.0
          %952 = vmatpush1.msra.mxu0 0.0
          %953 = vmatprep.subr.mxu0 0.0
          %954 = vmatpush1.msra.mxu0 0.0
          %955 = vmatprep.subr.mxu0 0.0
          %956 = vmatpush1.msra.mxu0 0.0
          %957 = vmatprep.subr.mxu0 0.0
          %958 = vmatpush1.msra.mxu0 0.0
          %959 = vmatprep.subr.mxu0 0.0
          %960 = vmatpush1.msra.mxu0 0.0
          %961 = vmatprep.subr.mxu0 0.0
          %962 = vmatpush1.msra.mxu0 0.0
          %963 = vmatprep.subr.mxu0 0.0
          %964 = vmatpush1.msra.mxu0 0.0
          %965 = vmatprep.subr.mxu0 0.0
          %966 = vmatpush1.msra.mxu0 0.0
          %967 = vmatprep.subr.mxu0 0.0
          %968 = vmatpush1.msra.mxu0 0.0
          %969 = vmatprep.subr.mxu0 0.0
          %970 = vmatpush1.msra.mxu0 0.0
          %971 = vmatprep.subr.mxu0 0.0
          %972 = vmatpush1.msra.mxu0 0.0
          %973 = vmatprep.subr.mxu0 0.0
          %974 = vmatpush1.msra.mxu0 0.0
          %975 = vmatprep.mubr.f32.mxu0 0.0
          %976 = vmatmul.mubr.f32.gmra.mrb[0].mxu0 %v884
          %v977 = vpop.f32.mrb[0].mxu0
          %v978 = vadd.f32 %v909, %v977
          %v979 = vpop.f32.mrb[0].mxu0
          %980 = vmatprep.mubr.f32.mxu0 0.0
          %981 = vmatmul.mubr.f32.gmra.mrb[0].mxu0 %v885
          %v982 = vpop.f32.mrb[0].mxu0
          %v983 = vadd.f32 %v909, %v982
          %v984 = vpop.f32.mrb[0].mxu0
          %985 = vdwg.mxu0
          %v986 = vxor.u32 %v978, 2147483648
          %v987 = vxor.u32 %v983, 2147483648
          %v988 = vmul.f32 %v986, 1.442695
          %v989 = vpow.pop %v988
          %v990 = vmul.f32 %v987, 1.442695
          %v991 = vpow.pop %v990
          %v992 = vadd.f32 %v989, 1.0
          %v993 = vadd.f32 %v991, 1.0
          %v994 = vrcp.pop %v992
          %v995 = vmul.f32 1.0, %v994
          %v996 = vrcp.pop %v993
          %v997 = vmul.f32 1.0, %v996
          %v998 = vmul.f32 %v978, %v995
          %v999 = vmul.f32 %v983, %v997
          %s1000 = scalar_lea.vmem [#allocation6], 256
          %v1001 = vld [vmem:[%s1000] sm:$0xff]
          %v1002 = vld [vmem:[%s1000 + $0x8] sm:$0xff]
          %v1003 = vld [vmem:[%s1000 + $0x10] sm:$0xff]
          %v1004 = vld [vmem:[%s1000 + $0x18] sm:$0xff]
          %v1005 = vld [vmem:[%s1000 + $0x20] sm:$0xff]
          %v1006 = vld [vmem:[%s1000 + $0x28] sm:$0xff]
          %v1007 = vld [vmem:[%s1000 + $0x30] sm:$0xff]
          %v1008 = vld [vmem:[%s1000 + $0x38] sm:$0xff]
          %v1009 = vld [vmem:[%s1000 + $0x40] sm:$0xff]
          %v1010 = vld [vmem:[%s1000 + $0x48] sm:$0xff]
          %v1011 = vld [vmem:[%s1000 + $0x50] sm:$0xff]
          %v1012 = vld [vmem:[%s1000 + $0x58] sm:$0xff]
          %v1013 = vld [vmem:[%s1000 + $0x60] sm:$0xff]
          %v1014 = vld [vmem:[%s1000 + $0x68] sm:$0xff]
          %v1015 = vld [vmem:[%s1000 + $0x70] sm:$0xff]
          %v1016 = vld [vmem:[%s1000 + $0x78] sm:$0xff]
          %s1017 = scalar_lea.vmem %s6, 2
          %v1018 = vld [vmem:[%s1017] sm:$0x1]
          %v1020 = vlaneseq
          %v1021 = vshrl.u32 %v1020, 7
          %v1022 = vsub.s32 0, %v1021
          %v1023 = vrot.slane %v1018, %v1022
          %1025 = vmatprep.subr.mxu0 0.0
          %1026 = vmatpush1.msra.mxu0 %v1001
          %1027 = vmatprep.subr.mxu0 0.0
          %1028 = vmatpush1.msra.mxu0 %v1002
          %1029 = vmatprep.subr.mxu0 0.0
          %1030 = vmatpush1.msra.mxu0 %v1003
          %1031 = vmatprep.subr.mxu0 0.0
          %1032 = vmatpush1.msra.mxu0 %v1004
          %1033 = vmatprep.subr.mxu0 0.0
          %1034 = vmatpush1.msra.mxu0 %v1005
          %1035 = vmatprep.subr.mxu0 0.0
          %1036 = vmatpush1.msra.mxu0 %v1006
          %1037 = vmatprep.subr.mxu0 0.0
          %1038 = vmatpush1.msra.mxu0 %v1007
          %1039 = vmatprep.subr.mxu0 0.0
          %1040 = vmatpush1.msra.mxu0 %v1008
          %1041 = vmatprep.subr.mxu0 0.0
          %1042 = vmatpush1.msra.mxu0 %v1009
          %1043 = vmatprep.subr.mxu0 0.0
          %1044 = vmatpush1.msra.mxu0 %v1010
          %1045 = vmatprep.subr.mxu0 0.0
          %1046 = vmatpush1.msra.mxu0 %v1011
          %1047 = vmatprep.subr.mxu0 0.0
          %1048 = vmatpush1.msra.mxu0 %v1012
          %1049 = vmatprep.subr.mxu0 0.0
          %1050 = vmatpush1.msra.mxu0 %v1013
          %1051 = vmatprep.subr.mxu0 0.0
          %1052 = vmatpush1.msra.mxu0 %v1014
          %1053 = vmatprep.subr.mxu0 0.0
          %1054 = vmatpush1.msra.mxu0 %v1015
          %1055 = vmatprep.subr.mxu0 0.0
          %1056 = vmatpush1.msra.mxu0 %v1016
          %1057 = vmatprep.subr.mxu0 0.0
          %1058 = vmatpush1.msra.mxu0 0.0
          %1059 = vmatprep.subr.mxu0 0.0
          %1060 = vmatpush1.msra.mxu0 0.0
          %1061 = vmatprep.subr.mxu0 0.0
          %1062 = vmatpush1.msra.mxu0 0.0
          %1063 = vmatprep.subr.mxu0 0.0
          %1064 = vmatpush1.msra.mxu0 0.0
          %1065 = vmatprep.subr.mxu0 0.0
          %1066 = vmatpush1.msra.mxu0 0.0
          %1067 = vmatprep.subr.mxu0 0.0
          %1068 = vmatpush1.msra.mxu0 0.0
          %1069 = vmatprep.subr.mxu0 0.0
          %1070 = vmatpush1.msra.mxu0 0.0
          %1071 = vmatprep.subr.mxu0 0.0
          %1072 = vmatpush1.msra.mxu0 0.0
          %1073 = vmatprep.subr.mxu0 0.0
          %1074 = vmatpush1.msra.mxu0 0.0
          %1075 = vmatprep.subr.mxu0 0.0
          %1076 = vmatpush1.msra.mxu0 0.0
          %1077 = vmatprep.subr.mxu0 0.0
          %1078 = vmatpush1.msra.mxu0 0.0
          %1079 = vmatprep.subr.mxu0 0.0
          %1080 = vmatpush1.msra.mxu0 0.0
          %1081 = vmatprep.subr.mxu0 0.0
          %1082 = vmatpush1.msra.mxu0 0.0
          %1083 = vmatprep.subr.mxu0 0.0
          %1084 = vmatpush1.msra.mxu0 0.0
          %1085 = vmatprep.subr.mxu0 0.0
          %1086 = vmatpush1.msra.mxu0 0.0
          %1087 = vmatprep.subr.mxu0 0.0
          %1088 = vmatpush1.msra.mxu0 0.0
          %1089 = vmatprep.mubr.f32.mxu0 0.0
          %1090 = vmatmul.mubr.f32.gmra.mrb[0].mxu0 %v998
          %v1091 = vpop.f32.mrb[0].mxu0
          %v1092 = vadd.f32 %v1023, %v1091
          %v1093 = vpop.f32.mrb[0].mxu0
          %1094 = vmatprep.mubr.f32.mxu0 0.0
          %1095 = vmatmul.mubr.f32.gmra.mrb[0].mxu0 %v999
          %v1096 = vpop.f32.mrb[0].mxu0
          %v1097 = vadd.f32 %v1023, %v1096
          %v1098 = vpop.f32.mrb[0].mxu0
          %1099 = vdwg.mxu0
          %v1100 = vxor.u32 %v1092, 2147483648
          %v1101 = vxor.u32 %v1097, 2147483648
          %v1102 = vmul.f32 %v1100, 1.442695
          %v1103 = vpow.pop %v1102
          %v1104 = vmul.f32 %v1101, 1.442695
          %v1105 = vpow.pop %v1104
          %v1106 = vadd.f32 %v1103, 1.0
          %v1107 = vadd.f32 %v1105, 1.0
          %v1108 = vrcp.pop %v1106
          %v1109 = vmul.f32 1.0, %v1108
          %v1110 = vrcp.pop %v1107
          %v1111 = vmul.f32 1.0, %v1110
          %v1112 = vmul.f32 %v1092, %v1109
          %v1113 = vmul.f32 %v1097, %v1111
          %1114 = vst [vmem:[#allocation8] sm:$0xff] %v1112
          %1115 = vst [vmem:[#allocation8 + $0x8] sm:$0xff] %v1113
        $region64: #{tpu_custom_call.1} parent=47 // pred_fallthru
          _
        // Predicated region
        $region65: #{tpu_custom_call.1} parent=47 // pred_check
          %p1116 = pneg %p196
        $region66: #{tpu_custom_call.1} parent=47 // pred_check_branch
          %1118 = sbr.rel (%p1116) target = $region68
        $region67: #{tpu_custom_call.1} parent=47 // pred_region
          %s1120 = ssub.s32 256, 256
          %1121 = vsyncadd [#allocation5], %s1120
          %s1122 = sshll.u32 [#allocation8], 4
          %s1123 = int_to_ptr.vmem [resolvable:$true] %s1122
          %1128 = dma.vmem_to_hbm [thread:$0]  %s1123, 256, %s7, [#allocation5], 128, 128, 8
        $region68: #{tpu_custom_call.1} parent=47 // pred_fallthru
          _
        // Predicated region
        $region69: #{tpu_custom_call.1} parent=47 // pred_check
          %p1129 = pneg %p196
        $region70: #{tpu_custom_call.1} parent=47 // pred_check_branch
          %1131 = sbr.rel (%p1129) target = $region72
        $region71: #{tpu_custom_call.1} parent=47 // pred_region
          %1132 = dma.done [#allocation5], 256
        $region72: #{tpu_custom_call.1} parent=47 // pred_fallthru
          _
      $region48: #{tpu_custom_call.1} parent=5 // pred_fallthru
        _
      %p1133 = scmp.le.s32.totalorder 2, %s16
      // Predicated region
      $region73: #{tpu_custom_call.1} parent=5 // pred_check
        %p1134 = pneg %p1133
      $region74: #{tpu_custom_call.1} parent=5 // pred_check_branch
        %1136 = sbr.rel (%p1134) target = $region76
      $region75: #{tpu_custom_call.1} parent=5 // pred_region
        %s1137 = ssub.s32 %s16, 2
      $region76: #{tpu_custom_call.1} parent=5 // pred_fallthru
        _
    $region6: #{tpu_custom_call.1} parent=1 // loop_footer
      %s20 = sadd.s32 1, %s16
    $region7: #{tpu_custom_call.1} parent=1 // loop_footer_branch
      %15 = sbr.rel target = $region3
    $region8: #{tpu_custom_call.1} parent=1 // loop_exit
      _
    %1138 = vsyncpa [#allocation4], 1
    %s1139 = scalar_lea.sflag [#allocation4], 1
    %1140 = vsyncpa %s1139, 1
    %1141 = vsyncpa [#allocation7], 1
    %1142 = vsyncpa [#allocation5], 1
    %s1143 = scalar_lea.sflag [#allocation5], 1
    %1144 = vsyncpa %s1143, 1

</llo_original>
